<compile_context>
chip_gen: v6e
topology: v6e:2x2x1
jax: 0.10.0
libtpu: 0.0.40
codegen_flags: <defaults>
</compile_context>

<pallas_src>
import functools

import jax
import jax.numpy as jnp
from jax.experimental import pallas as pl
from jax.experimental.pallas import tpu as pltpu


MLPS = [64, 64, 64, 128, 1024]   # matches PointNet.__init__ defaults
IN_DIM = 3
C_PAD = 8                        # channels padded so layer 0 runs on the MXU
TILE_M_MAX = 1024                # target rows (points x folded batches) per grid step


def _round_up(x, m):
    return (x + m - 1) // m * m


def _pointnet_kernel(x_ref,
                     w0_ref, b0_ref, w1_ref, b1_ref, w2_ref, b2_ref,
                     w3_ref, b3_ref, w4_ref, b4_ref,
                     out_ref,
                     *, n_valid, tile_n, kb, inner_tiles, point_splits, needs_mask):
    """Grid = (groups, inner point tiles).

    x_ref:   (kb, tile_n, 8)  VMEM f32 — kb folded batches x tile_n points x padded chans
    wK_ref:  (Cin_K, Cout_K)  VMEM bf16 (constant-index, resident)
    bK_ref:  (1, Cout_K)      VMEM f32
    out_ref: (1, kb, 1024)    VMEM f32 — running-max accumulator across the tile axis.
    """
    g = pl.program_id(0)
    t = pl.program_id(1)

    @pl.when(t == 0)
    def _init():
        out_ref[...] = jnp.full_like(out_ref, -jnp.inf)

    tile_m = kb * tile_n
    c_in = x_ref.shape[-1]
    x = x_ref[...].reshape(tile_m, c_in).astype(jnp.bfloat16)

    # ---- 5 Conv1d(k=1) layers as MXU matmuls, bf16 in / f32 accumulate ----
    def layer(h_bf16, w_ref, b_ref):
        y = jnp.dot(h_bf16, w_ref[...], preferred_element_type=jnp.float32)
        return jnp.maximum(y + b_ref[...], 0.0)

    h = layer(x, w0_ref, b0_ref)                          # K = 8 (zero-padded channels)
    h = layer(h.astype(jnp.bfloat16), w1_ref, b1_ref)
    h = layer(h.astype(jnp.bfloat16), w2_ref, b2_ref)
    h = layer(h.astype(jnp.bfloat16), w3_ref, b3_ref)
    h = layer(h.astype(jnp.bfloat16), w4_ref, b4_ref)     # (tile_m, 1024) f32

    # Global point index of the first row of this tile.
    if point_splits > 1:
        tile_base = (g * inner_tiles + t) * tile_n
    else:
        tile_base = t * tile_n

    def reduce_fold(masked):
        # Per-batch max over points, two-stage: VPU fold of 8-row chunks, then one 8-row
        # sublane reduce per batch.  Fold the result into the running max.
        if masked:
            local = jax.lax.broadcasted_iota(jnp.int32, (tile_n, 1), 0)
            valid = local < (n_valid - tile_base)
        rows = []
        for b in range(kb):
            hb = h[b * tile_n:(b + 1) * tile_n, :]
            if masked:
                hb = jnp.where(valid, hb, -jnp.inf)
            part = hb[0:8, :]
            for i in range(1, tile_n // 8):
                part = jnp.maximum(part, hb[i * 8:(i + 1) * 8, :])   # VPU, vreg-aligned
            rows.append(jnp.max(part, axis=0, keepdims=True))        # (1, 1024) XLU reduce
        tile_max = rows[0] if kb == 1 else jnp.concatenate(rows, axis=0)
        out_ref[0] = jnp.maximum(out_ref[0], tile_max)

    if not needs_mask:
        reduce_fold(False)
    elif inner_tiles * point_splits == 1:
        reduce_fold(True)                                  # single tile: always boundary
    else:
        crosses_end = (tile_base + tile_n) > n_valid       # mask only on boundary tiles

        @pl.when(jnp.logical_not(crosses_end))
        def _unmasked():
            reduce_fold(False)

        @pl.when(crosses_end)
        def _masked():
            reduce_fold(True)


def pointnet_forward(x_bcn, weights, biases, *, tile_m_max=TILE_M_MAX):
    """x_bcn: (B, 3, N) float32 — PyTorch Conv1d layout.  Returns (B, 1024) f32."""
    B, C_in, N = x_bcn.shape
    assert C_in == IN_DIM and B >= 1 and N >= 1
    C_out = MLPS[-1]
    tile_m_max = max(8, _round_up(tile_m_max, 8))

    N8 = _round_up(N, 8)

    if N8 <= tile_m_max:
        # One point-tile per batch; fold several batches into the rows (M) dimension.
        point_splits = 1
        inner_tiles = 1
        tile_n = N8
        kb = min(B, max(1, tile_m_max // tile_n))
        num_groups = pl.cdiv(B, kb)
        num_groups = max(num_groups, min(B, 2))        # keep >=2 parallel items for v7x
        kb = pl.cdiv(B, num_groups)
        B_pad = num_groups * kb
        n_pad = tile_n
    else:
        # Tile each batch's points; balanced tile size instead of fixed size + padding.
        kb = 1
        B_pad = B
        point_splits = 1 if B >= 2 else 2              # v7x: feed both cores when B == 1
        n_tiles = pl.cdiv(N, tile_m_max)
        if point_splits > 1:
            n_tiles = _round_up(n_tiles, point_splits)
        tile_n = _round_up(pl.cdiv(N, n_tiles), 8)
        n_tiles = pl.cdiv(N, tile_n)
        if point_splits > 1:
            n_tiles = _round_up(n_tiles, point_splits)
        num_groups = B if point_splits == 1 else point_splits
        inner_tiles = n_tiles // point_splits
        n_pad = n_tiles * tile_n

    needs_mask = (n_pad != N)

    # (B, 3, N) -> (B_pad, N_pad, 8): points on sublanes, zero-padded channels on lanes.
    # TODO(synk): could consume the native (B, 3, N) layout with an in-kernel transpose;
    # this prep pass is negligible here since the kernel is heavily compute-bound.
    x = jnp.transpose(x_bcn, (0, 2, 1)).astype(jnp.float32)
    x = jnp.pad(x, ((0, B_pad - B), (0, n_pad - N), (0, C_PAD - C_in)))

    # Weights stored as (Cin, Cout) bf16 so the kernel computes rows @ W on the MXU.
    wts = [jnp.transpose(w, (1, 0)).astype(jnp.bfloat16) for w in weights]
    wts[0] = jnp.pad(wts[0], ((0, C_PAD - C_in), (0, 0)))       # zero rows for padded chans
    bss = [b.reshape(1, -1).astype(jnp.float32) for b in biases]

    if point_splits > 1:
        x_index = lambda g, t: (0, g * inner_tiles + t, 0)
    else:
        x_index = lambda g, t: (g, t, 0)

    in_specs = [pl.BlockSpec((kb, tile_n, C_PAD), x_index)]
    flat_params = []
    for w, b in zip(wts, bss):
        # Full-array, constant-index blocks: never re-fetched across grid steps.
        # TODO(synk): pipeline_mode=pl.Buffered(1) would reclaim the second buffer for
        # these constants; skipped since support is uneven across pallas_call paths.
        in_specs.append(pl.BlockSpec(w.shape, lambda g, t: (0, 0)))
        in_specs.append(pl.BlockSpec(b.shape, lambda g, t: (0, 0)))
        flat_params.extend([w, b])

    # Same output block for every point tile => resident accumulator across the t axis.
    out_spec = pl.BlockSpec((1, kb, C_out), lambda g, t: (g, 0, 0))

    total_rows = num_groups * kb * inner_tiles * tile_n
    dims = list(zip([C_PAD] + MLPS[:-1], MLPS))
    flops = 2 * total_rows * sum(ci * co for ci, co in dims)
    bytes_accessed = (int(x.size) * x.dtype.itemsize
                      + sum(int(w.size) * 2 for w in wts)
                      + sum(int(b.size) * 4 for b in bss)
                      + num_groups * kb * C_out * 4)

    kernel = functools.partial(
        _pointnet_kernel, n_valid=N, tile_n=tile_n, kb=kb,
        inner_tiles=inner_tiles, point_splits=point_splits, needs_mask=needs_mask)

    fn = pl.pallas_call(
        kernel,
        out_shape=jax.ShapeDtypeStruct((num_groups, kb, C_out), jnp.float32),
        grid_spec=pltpu.PrefetchScalarGridSpec(
            num_scalar_prefetch=0,
            grid=(num_groups, inner_tiles),
            in_specs=in_specs,
            out_specs=out_spec,
        ),
        compiler_params=pltpu.CompilerParams(
            dimension_semantics=("parallel", "arbitrary"),
            vmem_limit_bytes=32 * 1024 * 1024,
        ),
        cost_estimate=pl.CostEstimate(flops=flops, transcendentals=0,
                                      bytes_accessed=int(bytes_accessed)),
    )
    out = fn(x, *flat_params)                       # (num_groups, kb, C_out)

    if point_splits > 1:
        return jnp.max(out, axis=0)                 # B == 1: combine the 2 partial maxes
    return out.reshape(num_groups * kb, C_out)[:B]  # drop padded batches


def _init_params(key):
    """Deterministic synthetic Conv1d(k=1) parameters: W_k (Cout, Cin), b_k (Cout,)."""
    weights, biases = [], []
    in_dim = IN_DIM
    for out_dim in MLPS:
        kw, kb_, key = jax.random.split(key, 3)
        bound = 1.0 / jnp.sqrt(float(in_dim))
        weights.append(jax.random.uniform(kw, (out_dim, in_dim), jnp.float32, -bound, bound))
        biases.append(jax.random.uniform(kb_, (out_dim,), jnp.float32, -bound, bound))
        in_dim = out_dim
    return weights, biases


def _reference_forward(x_bcn, weights, biases):
    """Pure-JAX reference mirroring the PyTorch module (with the kernel's bf16 matmul dtypes)."""
    h = jnp.transpose(x_bcn, (0, 2, 1)).astype(jnp.float32)        # (B, N, C)
    for w, b in zip(weights, biases):
        wt = jnp.transpose(w, (1, 0))
        y = jnp.einsum("bnc,co->bno", h.astype(jnp.bfloat16), wt.astype(jnp.bfloat16),
                       preferred_element_type=jnp.float32)
        h = jnp.maximum(y + b.astype(jnp.float32), 0.0)
    return jnp.max(h, axis=1)                                      # (B, 1024)


if __name__ == "__main__":
    key = jax.random.PRNGKey(0)
    kx, kp = jax.random.split(key)
    weights, biases = _init_params(kp)

    # (B, N, tile_m_max) cases exercising every code path:
    #  (2, 16):   batch-parallel small-N path, no padding mask
    #  (2, 300):  single balanced tile per batch + padding mask
    #  (3, 20):   batch folding (kb > 1) + batch padding + point padding
    #  (2, 602):  multi point-tile accumulator + boundary-only mask (small test tile)
    #  (1, 700):  B == 1 point-split across the parallel axis (v7x dual-core)
    cases = [(2, 16, 1024), (2, 300, 1024), (3, 20, 1024), (2, 602, 256), (1, 700, 256)]
    for (B, N, tmm) in cases:
        kx, sub = jax.random.split(kx)
        x = jax.random.normal(sub, (B, IN_DIM, N), jnp.float32)   # PyTorch (B, C, N) layout

        out = jax.block_until_ready(pointnet_forward(x, weights, biases, tile_m_max=tmm))
        ref = _reference_forward(x, weights, biases)

        assert out.shape == (B, MLPS[-1]), (out.shape, B)
        err = float(jnp.max(jnp.abs(out - ref)))
        assert jnp.allclose(out, ref, atol=1e-2, rtol=1e-2), (B, N, err)

    print("KERNEL_OK")
</pallas_src>

<mosaic_0001>
module attributes {stable_mosaic.version = 11 : i64} {
  func.func @_pointnet_kernel(%arg0: i32, %arg1: i32, %arg2: memref<1x16x8xf32, #tpu.memory_space<vmem>>, %arg3: memref<8x64xbf16, #tpu.memory_space<vmem>>, %arg4: memref<1x64xf32, #tpu.memory_space<vmem>>, %arg5: memref<64x64xbf16, #tpu.memory_space<vmem>>, %arg6: memref<1x64xf32, #tpu.memory_space<vmem>>, %arg7: memref<64x64xbf16, #tpu.memory_space<vmem>>, %arg8: memref<1x64xf32, #tpu.memory_space<vmem>>, %arg9: memref<64x128xbf16, #tpu.memory_space<vmem>>, %arg10: memref<1x128xf32, #tpu.memory_space<vmem>>, %arg11: memref<128x1024xbf16, #tpu.memory_space<vmem>>, %arg12: memref<1x1024xf32, #tpu.memory_space<vmem>>, %arg13: memref<1x1x1024xf32, #tpu.memory_space<vmem>>) attributes {dimension_semantics = [#tpu.dimension_semantics<parallel>, #tpu.dimension_semantics<arbitrary>], iteration_bounds = array<i64: 2, 1>, scalar_prefetch = 0 : i64, scratch_operands = 0 : i64, tpu.core_type = #tpu.core_type<tc>, window_params = [{transform_indices = @transform_0, window_bounds = array<i64: 1, 16, 8>}, {pipeline_mode = #tpu.pipeline_mode<synchronous>, transform_indices = @transform_1, window_bounds = array<i64: 8, 64>}, {pipeline_mode = #tpu.pipeline_mode<synchronous>, transform_indices = @transform_2, window_bounds = array<i64: 1, 64>}, {pipeline_mode = #tpu.pipeline_mode<synchronous>, transform_indices = @transform_3, window_bounds = array<i64: 64, 64>}, {pipeline_mode = #tpu.pipeline_mode<synchronous>, transform_indices = @transform_4, window_bounds = array<i64: 1, 64>}, {pipeline_mode = #tpu.pipeline_mode<synchronous>, transform_indices = @transform_5, window_bounds = array<i64: 64, 64>}, {pipeline_mode = #tpu.pipeline_mode<synchronous>, transform_indices = @transform_6, window_bounds = array<i64: 1, 64>}, {pipeline_mode = #tpu.pipeline_mode<synchronous>, transform_indices = @transform_7, window_bounds = array<i64: 64, 128>}, {pipeline_mode = #tpu.pipeline_mode<synchronous>, transform_indices = @transform_8, window_bounds = array<i64: 1, 128>}, {pipeline_mode = #tpu.pipeline_mode<synchronous>, transform_indices = @transform_9, window_bounds = array<i64: 128, 1024>}, {pipeline_mode = #tpu.pipeline_mode<synchronous>, transform_indices = @transform_10, window_bounds = array<i64: 1, 1024>}, {transform_indices = @transform_11, window_bounds = array<i64: 1, 1, 1024>}]} {
    %c0_i32 = arith.constant 0 : i32
    %0 = arith.cmpi eq, %arg1, %c0_i32 : i32
    %1 = arith.extui %0 : i1 to i32
    %c0_i32_0 = arith.constant 0 : i32
    %2 = arith.cmpi ne, %1, %c0_i32_0 : i32
    scf.if %2 {
      %cst_39 = arith.constant 0xFF800000 : f32
      %56 = vector.broadcast %cst_39 : f32 to vector<1x1x1024xf32>
      %c0_40 = arith.constant 0 : index
      %c0_41 = arith.constant 0 : index
      %c0_42 = arith.constant 0 : index
      %57 = vector.load %arg13[%c0_40, %c0_41, %c0_42] : memref<1x1x1024xf32, #tpu.memory_space<vmem>>, vector<1x1x1024xf32>
      tpu.vector_store %arg13[%c0_40, %c0_41, %c0_42], %56 {strides = array<i32>} : memref<1x1x1024xf32, #tpu.memory_space<vmem>>, vector<1x1x1024xf32>,
    } else {
    }
    %c0 = arith.constant 0 : index
    %c0_1 = arith.constant 0 : index
    %c0_2 = arith.constant 0 : index
    %3 = vector.load %arg2[%c0, %c0_1, %c0_2] : memref<1x16x8xf32, #tpu.memory_space<vmem>>, vector<1x16x8xf32>
    %4 = vector.shape_cast %3 : vector<1x16x8xf32> to vector<16x8xf32>
    %5 = arith.truncf %4 : vector<16x8xf32> to vector<16x8xbf16>
    %c0_3 = arith.constant 0 : index
    %c0_4 = arith.constant 0 : index
    %6 = vector.load %arg3[%c0_3, %c0_4] : memref<8x64xbf16, #tpu.memory_space<vmem>>, vector<8x64xbf16>
    %cst = arith.constant dense<0.000000e+00> : vector<16x64xf32>
    %7 = tpu.matmul %5, %6, %cst {dimension_numbers = #tpu.dot_dimension_numbers<[1], [0], [0], [1], [0, 0, 1, 1], [], []>} : vector<16x8xbf16>, vector<8x64xbf16>, vector<16x64xf32> -> vector<16x64xf32>
    %c0_5 = arith.constant 0 : index
    %c0_6 = arith.constant 0 : index
    %8 = vector.load %arg4[%c0_5, %c0_6] : memref<1x64xf32, #tpu.memory_space<vmem>>, vector<1x64xf32>
    %9 = vector.broadcast %8 : vector<1x64xf32> to vector<16x64xf32>
    %10 = arith.addf %7, %9 : vector<16x64xf32>
    %cst_7 = arith.constant 0.000000e+00 : f32
    %11 = vector.broadcast %cst_7 : f32 to vector<16x64xf32>
    %12 = arith.maximumf %10, %11 : vector<16x64xf32>
    %13 = arith.truncf %12 : vector<16x64xf32> to vector<16x64xbf16>
    %c0_8 = arith.constant 0 : index
    %c0_9 = arith.constant 0 : index
    %14 = vector.load %arg5[%c0_8, %c0_9] : memref<64x64xbf16, #tpu.memory_space<vmem>>, vector<64x64xbf16>
    %cst_10 = arith.constant dense<0.000000e+00> : vector<16x64xf32>
    %15 = tpu.matmul %13, %14, %cst_10 {dimension_numbers = #tpu.dot_dimension_numbers<[1], [0], [0], [1], [0, 0, 1, 1], [], []>} : vector<16x64xbf16>, vector<64x64xbf16>, vector<16x64xf32> -> vector<16x64xf32>
    %c0_11 = arith.constant 0 : index
    %c0_12 = arith.constant 0 : index
    %16 = vector.load %arg6[%c0_11, %c0_12] : memref<1x64xf32, #tpu.memory_space<vmem>>, vector<1x64xf32>
    %17 = vector.broadcast %16 : vector<1x64xf32> to vector<16x64xf32>
    %18 = arith.addf %15, %17 : vector<16x64xf32>
    %cst_13 = arith.constant 0.000000e+00 : f32
    %19 = vector.broadcast %cst_13 : f32 to vector<16x64xf32>
    %20 = arith.maximumf %18, %19 : vector<16x64xf32>
    %21 = arith.truncf %20 : vector<16x64xf32> to vector<16x64xbf16>
    %c0_14 = arith.constant 0 : index
    %c0_15 = arith.constant 0 : index
    %22 = vector.load %arg7[%c0_14, %c0_15] : memref<64x64xbf16, #tpu.memory_space<vmem>>, vector<64x64xbf16>
    %cst_16 = arith.constant dense<0.000000e+00> : vector<16x64xf32>
    %23 = tpu.matmul %21, %22, %cst_16 {dimension_numbers = #tpu.dot_dimension_numbers<[1], [0], [0], [1], [0, 0, 1, 1], [], []>} : vector<16x64xbf16>, vector<64x64xbf16>, vector<16x64xf32> -> vector<16x64xf32>
    %c0_17 = arith.constant 0 : index
    %c0_18 = arith.constant 0 : index
    %24 = vector.load %arg8[%c0_17, %c0_18] : memref<1x64xf32, #tpu.memory_space<vmem>>, vector<1x64xf32>
    %25 = vector.broadcast %24 : vector<1x64xf32> to vector<16x64xf32>
    %26 = arith.addf %23, %25 : vector<16x64xf32>
    %cst_19 = arith.constant 0.000000e+00 : f32
    %27 = vector.broadcast %cst_19 : f32 to vector<16x64xf32>
    %28 = arith.maximumf %26, %27 : vector<16x64xf32>
    %29 = arith.truncf %28 : vector<16x64xf32> to vector<16x64xbf16>
    %c0_20 = arith.constant 0 : index
    %c0_21 = arith.constant 0 : index
    %30 = vector.load %arg9[%c0_20, %c0_21] : memref<64x128xbf16, #tpu.memory_space<vmem>>, vector<64x128xbf16>
    %cst_22 = arith.constant dense<0.000000e+00> : vector<16x128xf32>
    %31 = tpu.matmul %29, %30, %cst_22 {dimension_numbers = #tpu.dot_dimension_numbers<[1], [0], [0], [1], [0, 0, 1, 1], [], []>} : vector<16x64xbf16>, vector<64x128xbf16>, vector<16x128xf32> -> vector<16x128xf32>
    %c0_23 = arith.constant 0 : index
    %c0_24 = arith.constant 0 : index
    %32 = vector.load %arg10[%c0_23, %c0_24] : memref<1x128xf32, #tpu.memory_space<vmem>>, vector<1x128xf32>
    %33 = vector.broadcast %32 : vector<1x128xf32> to vector<16x128xf32>
    %34 = arith.addf %31, %33 : vector<16x128xf32>
    %cst_25 = arith.constant 0.000000e+00 : f32
    %35 = vector.broadcast %cst_25 : f32 to vector<16x128xf32>
    %36 = arith.maximumf %34, %35 : vector<16x128xf32>
    %37 = arith.truncf %36 : vector<16x128xf32> to vector<16x128xbf16>
    %c0_26 = arith.constant 0 : index
    %c0_27 = arith.constant 0 : index
    %38 = vector.load %arg11[%c0_26, %c0_27] : memref<128x1024xbf16, #tpu.memory_space<vmem>>, vector<128x1024xbf16>
    %cst_28 = arith.constant dense<0.000000e+00> : vector<16x1024xf32>
    %39 = tpu.matmul %37, %38, %cst_28 {dimension_numbers = #tpu.dot_dimension_numbers<[1], [0], [0], [1], [0, 0, 1, 1], [], []>} : vector<16x128xbf16>, vector<128x1024xbf16>, vector<16x1024xf32> -> vector<16x1024xf32>
    %c0_29 = arith.constant 0 : index
    %c0_30 = arith.constant 0 : index
    %40 = vector.load %arg12[%c0_29, %c0_30] : memref<1x1024xf32, #tpu.memory_space<vmem>>, vector<1x1024xf32>
    %41 = vector.broadcast %40 : vector<1x1024xf32> to vector<16x1024xf32>
    %42 = arith.addf %39, %41 : vector<16x1024xf32>
    %cst_31 = arith.constant 0.000000e+00 : f32
    %43 = vector.broadcast %cst_31 : f32 to vector<16x1024xf32>
    %44 = arith.maximumf %42, %43 : vector<16x1024xf32>
    %45 = vector.extract_strided_slice %44 {offsets = [0, 0], sizes = [8, 1024], strides = [1, 1]} : vector<16x1024xf32> to vector<8x1024xf32>
    %46 = vector.extract_strided_slice %44 {offsets = [8, 0], sizes = [8, 1024], strides = [1, 1]} : vector<16x1024xf32> to vector<8x1024xf32>
    %47 = arith.maximumf %45, %46 : vector<8x1024xf32>
    %cst_32 = arith.constant dense<0xFF800000> : vector<1024xf32>
    %48 = vector.multi_reduction <maximumf>, %47, %cst_32 [0] : vector<8x1024xf32> to vector<1024xf32>
    %49 = vector.shape_cast %48 : vector<1024xf32> to vector<1x1024xf32>
    %c0_33 = arith.constant 0 : index
    %c0_34 = arith.constant 0 : index
    %c0_35 = arith.constant 0 : index
    %50 = vector.load %arg13[%c0_33, %c0_34, %c0_35] : memref<1x1x1024xf32, #tpu.memory_space<vmem>>, vector<1x1x1024xf32>
    %51 = vector.shape_cast %50 : vector<1x1x1024xf32> to vector<1x1024xf32>
    %52 = arith.maximumf %51, %49 : vector<1x1024xf32>
    %c0_36 = arith.constant 0 : index
    %c0_37 = arith.constant 0 : index
    %c0_38 = arith.constant 0 : index
    %53 = vector.load %arg13[%c0_36, %c0_37, %c0_38] : memref<1x1x1024xf32, #tpu.memory_space<vmem>>, vector<1x1x1024xf32>
    %54 = vector.shape_cast %53 : vector<1x1x1024xf32> to vector<1x1024xf32>
    %55 = vector.shape_cast %52 : vector<1x1024xf32> to vector<1x1x1024xf32>
    tpu.vector_store %arg13[%c0_36, %c0_37, %c0_38], %55 {strides = array<i32>} : memref<1x1x1024xf32, #tpu.memory_space<vmem>>, vector<1x1x1024xf32>,
    return
  }
  func.func @transform_0(%arg0: i32, %arg1: i32) -> (i32, i32, i32) {
    %c0_i32 = arith.constant 0 : i32
    %c0_i32_0 = arith.constant 0 : i32
    return %arg0, %arg1, %c0_i32 : i32, i32, i32
  }
  func.func @transform_1(%arg0: i32, %arg1: i32) -> (i32, i32) {
    %c0_i32 = arith.constant 0 : i32
    %c0_i32_0 = arith.constant 0 : i32
    %c0_i32_1 = arith.constant 0 : i32
    return %c0_i32, %c0_i32_0 : i32, i32
  }
  func.func @transform_2(%arg0: i32, %arg1: i32) -> (i32, i32) {
    %c0_i32 = arith.constant 0 : i32
    %c0_i32_0 = arith.constant 0 : i32
    %c0_i32_1 = arith.constant 0 : i32
    return %c0_i32, %c0_i32_0 : i32, i32
  }
  func.func @transform_3(%arg0: i32, %arg1: i32) -> (i32, i32) {
    %c0_i32 = arith.constant 0 : i32
    %c0_i32_0 = arith.constant 0 : i32
    %c0_i32_1 = arith.constant 0 : i32
    return %c0_i32, %c0_i32_0 : i32, i32
  }
  func.func @transform_4(%arg0: i32, %arg1: i32) -> (i32, i32) {
    %c0_i32 = arith.constant 0 : i32
    %c0_i32_0 = arith.constant 0 : i32
    %c0_i32_1 = arith.constant 0 : i32
    return %c0_i32, %c0_i32_0 : i32, i32
  }
  func.func @transform_5(%arg0: i32, %arg1: i32) -> (i32, i32) {
    %c0_i32 = arith.constant 0 : i32
    %c0_i32_0 = arith.constant 0 : i32
    %c0_i32_1 = arith.constant 0 : i32
    return %c0_i32, %c0_i32_0 : i32, i32
  }
  func.func @transform_6(%arg0: i32, %arg1: i32) -> (i32, i32) {
    %c0_i32 = arith.constant 0 : i32
    %c0_i32_0 = arith.constant 0 : i32
    %c0_i32_1 = arith.constant 0 : i32
    return %c0_i32, %c0_i32_0 : i32, i32
  }
  func.func @transform_7(%arg0: i32, %arg1: i32) -> (i32, i32) {
    %c0_i32 = arith.constant 0 : i32
    %c0_i32_0 = arith.constant 0 : i32
    %c0_i32_1 = arith.constant 0 : i32
    return %c0_i32, %c0_i32_0 : i32, i32
  }
  func.func @transform_8(%arg0: i32, %arg1: i32) -> (i32, i32) {
    %c0_i32 = arith.constant 0 : i32
    %c0_i32_0 = arith.constant 0 : i32
    %c0_i32_1 = arith.constant 0 : i32
    return %c0_i32, %c0_i32_0 : i32, i32
  }
  func.func @transform_9(%arg0: i32, %arg1: i32) -> (i32, i32) {
    %c0_i32 = arith.constant 0 : i32
    %c0_i32_0 = arith.constant 0 : i32
    %c0_i32_1 = arith.constant 0 : i32
    return %c0_i32, %c0_i32_0 : i32, i32
  }
  func.func @transform_10(%arg0: i32, %arg1: i32) -> (i32, i32) {
    %c0_i32 = arith.constant 0 : i32
    %c0_i32_0 = arith.constant 0 : i32
    %c0_i32_1 = arith.constant 0 : i32
    return %c0_i32, %c0_i32_0 : i32, i32
  }
  func.func @transform_11(%arg0: i32, %arg1: i32) -> (i32, i32, i32) {
    %c0_i32 = arith.constant 0 : i32
    %c0_i32_0 = arith.constant 0 : i32
    %c0_i32_1 = arith.constant 0 : i32
    return %arg0, %c0_i32, %c0_i32_0 : i32, i32, i32
  }
}

</mosaic_0001>

<llo_original>
// kernel: tpu_custom_call.1
$region0: #{tpu_custom_call.1}
  #allocation0 [shape = 'u32[]', space=smem, size = 0x4, offset = 0x4, fixed_abs, tag = 'smem constant byte address 0x4 - core index']
  #allocation1 [shape = 'u32[144,128]{1,0:T(1,128)}', space=vmem, size = 0x12000, scoped, tag = 'internal scratch']
  %s0 = inlined_call_operand.vmem [shape: f32[2,16,8], index: 0, kind: input, shape index: {}]
  %s1 = inlined_call_operand.vmem [shape: bf16[8,64], index: 1, kind: input, shape index: {}]
  %s2 = inlined_call_operand.vmem [shape: f32[1,64], index: 2, kind: input, shape index: {}]
  %s3 = inlined_call_operand.vmem [shape: bf16[64,64], index: 3, kind: input, shape index: {}]
  %s4 = inlined_call_operand.vmem [shape: f32[1,64], index: 4, kind: input, shape index: {}]
  %s5 = inlined_call_operand.hbm [shape: bf16[64,64], index: 5, kind: input, shape index: {}]
  %s6 = inlined_call_operand.vmem [shape: f32[1,64], index: 6, kind: input, shape index: {}]
  %s7 = inlined_call_operand.hbm [shape: bf16[64,128], index: 7, kind: input, shape index: {}]
  %s8 = inlined_call_operand.vmem [shape: f32[1,128], index: 8, kind: input, shape index: {}]
  %s9 = inlined_call_operand.hbm [shape: bf16[128,1024], index: 9, kind: input, shape index: {}]
  %s10 = inlined_call_operand.vmem [shape: f32[1,1024], index: 10, kind: input, shape index: {}]
  %s11 = inlined_call_operand.hbm [shape: f32[2,1,1024], index: 11, kind: output, shape index: {}]
  %s12 = sld [smem:[#allocation0]]
  $region93: #{tpu_custom_call.1} parent=0
    _
  %s14 = ssub.s32 1, %s12
  %s15 = scalar_select 0, %s14, %s12
  $region1: #{tpu_custom_call.1} parent=0
    #allocation2 [shape = 'u8[16384]{0}', space=vmem, size = 0x4000, scoped, tag = 'input window, operand 5, single buffered']
    #allocation3 [shape = 's32[2]{0}', space=sflag, size = 0x8, scoped, tag = 'scoped memory for tpu_custom_call.1']
    #allocation4 [shape = 's32[2]{0}', space=sflag, size = 0x8, scoped, tag = 'scoped memory for tpu_custom_call.1']
    #allocation5 [shape = 'u8[16384]{0}', space=vmem, size = 0x4000, scoped, tag = 'input window, operand 7, single buffered']
    #allocation6 [shape = 's32[1]{0}', space=sflag, size = 0x4, scoped, tag = 'scoped memory for tpu_custom_call.1']
    #allocation7 [shape = 'u8[262144]{0}', space=vmem, size = 0x40000, scoped, tag = 'input window, operand 9, single buffered']
    #allocation8 [shape = 'u8[8192]{0}', space=vmem, size = 0x2000, scoped, tag = 'output window, operand 0']
    %16 = vsyncpa [#allocation3], 0
    %17 = vsyncpa [#allocation6], 0
    %18 = vsyncpa [#allocation4], 0
    %s19 = scalar_lea.sflag [#allocation4], 1
    %20 = vsyncpa %s19, 0
    loop: start=0, step=1, limit=4
    $region2: #{tpu_custom_call.1} parent=1 // loop_pre_header
      _
    $region3: #{tpu_custom_call.1} parent=1 // loop_header
      %s22 = sphi 0, %s26
      %p23 = scmp.ge.s32.totalorder %s22, 4
      %s29 = sphi 0, %s41
      %s30 = sphi 0, %s37
      %s31 = sphi 0, %s29
      %s32 = sphi 0, %s30
      %s33 = sphi 0, %s31
      %s34 = sphi 0, %s32
      %s46 = sphi 0, %s48
      %s49 = sphi 0, %s46
      %s50 = sphi 0, %s49
      %s66 = sphi 0, %s50
      %s70 = sphi 0, %s70
      %s72 = sphi 0, %s70
      %s73 = sphi 0, %s72
      %s87 = sphi 0, %s73
      %s91 = sphi 0, %s91
      %s93 = sphi 0, %s91
      %s94 = sphi 0, %s93
      %s108 = sphi 0, %s94
      %s112 = sphi 0, %s112
      %s114 = sphi 0, %s112
      %s115 = sphi 0, %s114
      %s129 = sphi 0, %s115
      %s133 = sphi 0, %s133
      %s135 = sphi 0, %s133
      %s136 = sphi 0, %s135
      %s150 = sphi 0, %s136
      %s154 = sphi 0, %s154
      %s156 = sphi 0, %s154
      %s157 = sphi 0, %s156
      %s171 = sphi 0, %s157
      %s175 = sphi 0, %s175
      %s177 = sphi 0, %s175
      %s178 = sphi 0, %s177
      %s192 = sphi 0, %s178
      %s196 = sphi 0, %s196
      %s198 = sphi 0, %s196
      %s199 = sphi 0, %s198
      %s213 = sphi 0, %s199
      %s217 = sphi 0, %s217
      %s219 = sphi 0, %s217
      %s220 = sphi 0, %s219
      %s234 = sphi 0, %s220
      %s238 = sphi 0, %s238
      %s240 = sphi 0, %s238
      %s241 = sphi 0, %s240
      %s255 = sphi 0, %s241
      %s259 = sphi 0, %s259
      %s261 = sphi 0, %s259
      %s262 = sphi 0, %s261
      %s276 = sphi 0, %s262
      %s282 = sphi 0, %s284
      %s285 = sphi 0, %s282
      %s286 = sphi 0, %s285
      %s302 = sphi 0, %s286
    $region4: #{tpu_custom_call.1} parent=1 // loop_header_branch
      %25 = sbr.rel (%p23) target = $region8
    $region5: #{tpu_custom_call.1} parent=1 // loop_body
      %s27 = ssub.s32 %s22, 1
      %s28 = ssub.s32 %s22, 2
      %s35 = sadd.s32 1, %s30
      %p36 = scmp.ge.s32.totalorder %s35, 1
      %s37 = scalar_select %p36, 0, %s35
      %s38 = sadd.s32 1, %s29
      %s39 = scalar_select %p36, %s38, %s29
      %p40 = scmp.ge.s32.totalorder %s39, 2
      %s41 = scalar_select %p40, 0, %s39
      %s42 = ssub.s32 %s29, %s41
      %s43 = ssub.s32 %s30, %s37
      %s44 = sor.u32 %s42, %s43
      %p45 = scmp.eq.s32.totalorder %s44, 0
      %s47 = sadd.s32 %s46, 1
      %s48 = scalar_select %p45, %s46, %s47
      %p51 = pneg %p45
      %p52 = scmp.eq.s32.totalorder %s22, 1
      %p53 = por %p51, %p52
      %p54 = scmp.ne.s32.totalorder %s46, %s49
      %p55 = scmp.eq.s32.totalorder %s22, 0
      %p56 = por %p54, %p55
      %p57 = scmp.ne.s32.totalorder %s46, %s49
      %p58 = scmp.eq.s32.totalorder %s27, 1
      %p59 = por %p57, %p58
      %p60 = scmp.ne.s32.totalorder %s49, %s50
      %p61 = scmp.eq.s32.totalorder %s27, 0
      %p62 = por %p60, %p61
      %p63 = scmp.ne.s32.totalorder %s49, %s50
      %p64 = scmp.eq.s32.totalorder %s28, 1
      %p65 = por %p63, %p64
      %p67 = scmp.ne.s32.totalorder %s50, %s66
      %p68 = scmp.eq.s32.totalorder %s28, 0
      %p69 = por %p67, %p68
      %s71 = sadd.s32 %s70, 1
      %p74 = scmp.eq.s32.totalorder %s22, 1
      %p75 = scmp.ne.s32.totalorder %s70, %s72
      %p76 = scmp.eq.s32.totalorder %s22, 0
      %p77 = por %p75, %p76
      %p78 = scmp.ne.s32.totalorder %s70, %s72
      %p79 = scmp.eq.s32.totalorder %s27, 1
      %p80 = por %p78, %p79
      %p81 = scmp.ne.s32.totalorder %s72, %s73
      %p82 = scmp.eq.s32.totalorder %s27, 0
      %p83 = por %p81, %p82
      %p84 = scmp.ne.s32.totalorder %s72, %s73
      %p85 = scmp.eq.s32.totalorder %s28, 1
      %p86 = por %p84, %p85
      %p88 = scmp.ne.s32.totalorder %s73, %s87
      %p89 = scmp.eq.s32.totalorder %s28, 0
      %p90 = por %p88, %p89
      %s92 = sadd.s32 %s91, 1
      %p95 = scmp.eq.s32.totalorder %s22, 1
      %p96 = scmp.ne.s32.totalorder %s91, %s93
      %p97 = scmp.eq.s32.totalorder %s22, 0
      %p98 = por %p96, %p97
      %p99 = scmp.ne.s32.totalorder %s91, %s93
      %p100 = scmp.eq.s32.totalorder %s27, 1
      %p101 = por %p99, %p100
      %p102 = scmp.ne.s32.totalorder %s93, %s94
      %p103 = scmp.eq.s32.totalorder %s27, 0
      %p104 = por %p102, %p103
      %p105 = scmp.ne.s32.totalorder %s93, %s94
      %p106 = scmp.eq.s32.totalorder %s28, 1
      %p107 = por %p105, %p106
      %p109 = scmp.ne.s32.totalorder %s94, %s108
      %p110 = scmp.eq.s32.totalorder %s28, 0
      %p111 = por %p109, %p110
      %s113 = sadd.s32 %s112, 1
      %p116 = scmp.eq.s32.totalorder %s22, 1
      %p117 = scmp.ne.s32.totalorder %s112, %s114
      %p118 = scmp.eq.s32.totalorder %s22, 0
      %p119 = por %p117, %p118
      %p120 = scmp.ne.s32.totalorder %s112, %s114
      %p121 = scmp.eq.s32.totalorder %s27, 1
      %p122 = por %p120, %p121
      %p123 = scmp.ne.s32.totalorder %s114, %s115
      %p124 = scmp.eq.s32.totalorder %s27, 0
      %p125 = por %p123, %p124
      %p126 = scmp.ne.s32.totalorder %s114, %s115
      %p127 = scmp.eq.s32.totalorder %s28, 1
      %p128 = por %p126, %p127
      %p130 = scmp.ne.s32.totalorder %s115, %s129
      %p131 = scmp.eq.s32.totalorder %s28, 0
      %p132 = por %p130, %p131
      %s134 = sadd.s32 %s133, 1
      %p137 = scmp.eq.s32.totalorder %s22, 1
      %p138 = scmp.ne.s32.totalorder %s133, %s135
      %p139 = scmp.eq.s32.totalorder %s22, 0
      %p140 = por %p138, %p139
      %p141 = scmp.ne.s32.totalorder %s133, %s135
      %p142 = scmp.eq.s32.totalorder %s27, 1
      %p143 = por %p141, %p142
      %p144 = scmp.ne.s32.totalorder %s135, %s136
      %p145 = scmp.eq.s32.totalorder %s27, 0
      %p146 = por %p144, %p145
      %p147 = scmp.ne.s32.totalorder %s135, %s136
      %p148 = scmp.eq.s32.totalorder %s28, 1
      %p149 = por %p147, %p148
      %p151 = scmp.ne.s32.totalorder %s136, %s150
      %p152 = scmp.eq.s32.totalorder %s28, 0
      %p153 = por %p151, %p152
      %s155 = sadd.s32 %s154, 1
      %p158 = scmp.eq.s32.totalorder %s22, 1
      %p159 = scmp.ne.s32.totalorder %s154, %s156
      %p160 = scmp.eq.s32.totalorder %s22, 0
      %p161 = por %p159, %p160
      %p162 = scmp.ne.s32.totalorder %s154, %s156
      %p163 = scmp.eq.s32.totalorder %s27, 1
      %p164 = por %p162, %p163
      %p165 = scmp.ne.s32.totalorder %s156, %s157
      %p166 = scmp.eq.s32.totalorder %s27, 0
      %p167 = por %p165, %p166
      %p168 = scmp.ne.s32.totalorder %s156, %s157
      %p169 = scmp.eq.s32.totalorder %s28, 1
      %p170 = por %p168, %p169
      %p172 = scmp.ne.s32.totalorder %s157, %s171
      %p173 = scmp.eq.s32.totalorder %s28, 0
      %p174 = por %p172, %p173
      %s176 = sadd.s32 %s175, 1
      %p179 = scmp.eq.s32.totalorder %s22, 1
      %p180 = scmp.ne.s32.totalorder %s175, %s177
      %p181 = scmp.eq.s32.totalorder %s22, 0
      %p182 = por %p180, %p181
      %p183 = scmp.ne.s32.totalorder %s175, %s177
      %p184 = scmp.eq.s32.totalorder %s27, 1
      %p185 = por %p183, %p184
      %p186 = scmp.ne.s32.totalorder %s177, %s178
      %p187 = scmp.eq.s32.totalorder %s27, 0
      %p188 = por %p186, %p187
      %p189 = scmp.ne.s32.totalorder %s177, %s178
      %p190 = scmp.eq.s32.totalorder %s28, 1
      %p191 = por %p189, %p190
      %p193 = scmp.ne.s32.totalorder %s178, %s192
      %p194 = scmp.eq.s32.totalorder %s28, 0
      %p195 = por %p193, %p194
      %s197 = sadd.s32 %s196, 1
      %p200 = scmp.eq.s32.totalorder %s22, 1
      %p201 = scmp.ne.s32.totalorder %s196, %s198
      %p202 = scmp.eq.s32.totalorder %s22, 0
      %p203 = por %p201, %p202
      %p204 = scmp.ne.s32.totalorder %s196, %s198
      %p205 = scmp.eq.s32.totalorder %s27, 1
      %p206 = por %p204, %p205
      %p207 = scmp.ne.s32.totalorder %s198, %s199
      %p208 = scmp.eq.s32.totalorder %s27, 0
      %p209 = por %p207, %p208
      %p210 = scmp.ne.s32.totalorder %s198, %s199
      %p211 = scmp.eq.s32.totalorder %s28, 1
      %p212 = por %p210, %p211
      %p214 = scmp.ne.s32.totalorder %s199, %s213
      %p215 = scmp.eq.s32.totalorder %s28, 0
      %p216 = por %p214, %p215
      %s218 = sadd.s32 %s217, 1
      %p221 = scmp.eq.s32.totalorder %s22, 1
      %p222 = scmp.ne.s32.totalorder %s217, %s219
      %p223 = scmp.eq.s32.totalorder %s22, 0
      %p224 = por %p222, %p223
      %p225 = scmp.ne.s32.totalorder %s217, %s219
      %p226 = scmp.eq.s32.totalorder %s27, 1
      %p227 = por %p225, %p226
      %p228 = scmp.ne.s32.totalorder %s219, %s220
      %p229 = scmp.eq.s32.totalorder %s27, 0
      %p230 = por %p228, %p229
      %p231 = scmp.ne.s32.totalorder %s219, %s220
      %p232 = scmp.eq.s32.totalorder %s28, 1
      %p233 = por %p231, %p232
      %p235 = scmp.ne.s32.totalorder %s220, %s234
      %p236 = scmp.eq.s32.totalorder %s28, 0
      %p237 = por %p235, %p236
      %s239 = sadd.s32 %s238, 1
      %p242 = scmp.eq.s32.totalorder %s22, 1
      %p243 = scmp.ne.s32.totalorder %s238, %s240
      %p244 = scmp.eq.s32.totalorder %s22, 0
      %p245 = por %p243, %p244
      %p246 = scmp.ne.s32.totalorder %s238, %s240
      %p247 = scmp.eq.s32.totalorder %s27, 1
      %p248 = por %p246, %p247
      %p249 = scmp.ne.s32.totalorder %s240, %s241
      %p250 = scmp.eq.s32.totalorder %s27, 0
      %p251 = por %p249, %p250
      %p252 = scmp.ne.s32.totalorder %s240, %s241
      %p253 = scmp.eq.s32.totalorder %s28, 1
      %p254 = por %p252, %p253
      %p256 = scmp.ne.s32.totalorder %s241, %s255
      %p257 = scmp.eq.s32.totalorder %s28, 0
      %p258 = por %p256, %p257
      %s260 = sadd.s32 %s259, 1
      %p263 = scmp.eq.s32.totalorder %s22, 1
      %p264 = scmp.ne.s32.totalorder %s259, %s261
      %p265 = scmp.eq.s32.totalorder %s22, 0
      %p266 = por %p264, %p265
      %p267 = scmp.ne.s32.totalorder %s259, %s261
      %p268 = scmp.eq.s32.totalorder %s27, 1
      %p269 = por %p267, %p268
      %p270 = scmp.ne.s32.totalorder %s261, %s262
      %p271 = scmp.eq.s32.totalorder %s27, 0
      %p272 = por %p270, %p271
      %p273 = scmp.ne.s32.totalorder %s261, %s262
      %p274 = scmp.eq.s32.totalorder %s28, 1
      %p275 = por %p273, %p274
      %p277 = scmp.ne.s32.totalorder %s262, %s276
      %p278 = scmp.eq.s32.totalorder %s28, 0
      %p279 = por %p277, %p278
      %s280 = ssub.s32 %s29, %s41
      %p281 = scmp.eq.s32.totalorder %s280, 0
      %s283 = sadd.s32 %s282, 1
      %s284 = scalar_select %p281, %s282, %s283
      %p287 = pneg %p281
      %p288 = scmp.eq.s32.totalorder %s22, 1
      %p289 = por %p287, %p288
      %p290 = scmp.ne.s32.totalorder %s282, %s285
      %p291 = scmp.eq.s32.totalorder %s22, 0
      %p292 = por %p290, %p291
      %p293 = scmp.ne.s32.totalorder %s282, %s285
      %p294 = scmp.eq.s32.totalorder %s27, 1
      %p295 = por %p293, %p294
      %p296 = scmp.ne.s32.totalorder %s285, %s286
      %p297 = scmp.eq.s32.totalorder %s27, 0
      %p298 = por %p296, %p297
      %p299 = scmp.ne.s32.totalorder %s285, %s286
      %p300 = scmp.eq.s32.totalorder %s28, 1
      %p301 = por %p299, %p300
      %p303 = scmp.ne.s32.totalorder %s286, %s302
      %p304 = scmp.eq.s32.totalorder %s28, 0
      %p305 = por %p303, %p304
      %p306 = scmp.le.s32.totalorder 1, %s22
      %p307 = scmp.lt.s32.totalorder %s22, 3
      %p308 = pnand %p306, %p307
      %p309 = pneg %p308
      // Predicated region
      $region9: #{tpu_custom_call.1} parent=5 // pred_check
        _
      $region10: #{tpu_custom_call.1} parent=5 // pred_check_branch
        %311 = sbr.rel (%p308) target = $region12
      $region11: #{tpu_custom_call.1} parent=5 // pred_region
        %s312 = ssub.s32 %s22, 1
        // Predicated region
        $region13: #{tpu_custom_call.1} parent=11 // pred_check
          %p313 = pneg %p83
        $region14: #{tpu_custom_call.1} parent=11 // pred_check_branch
          %315 = sbr.rel (%p313) target = $region16
        $region15: #{tpu_custom_call.1} parent=11 // pred_region
          _
        $region16: #{tpu_custom_call.1} parent=11 // pred_fallthru
          _
        // Predicated region
        $region17: #{tpu_custom_call.1} parent=11 // pred_check
          %p316 = pneg %p104
        $region18: #{tpu_custom_call.1} parent=11 // pred_check_branch
          %318 = sbr.rel (%p316) target = $region20
        $region19: #{tpu_custom_call.1} parent=11 // pred_region
          _
        $region20: #{tpu_custom_call.1} parent=11 // pred_fallthru
          _
        // Predicated region
        $region21: #{tpu_custom_call.1} parent=11 // pred_check
          %p319 = pneg %p125
        $region22: #{tpu_custom_call.1} parent=11 // pred_check_branch
          %321 = sbr.rel (%p319) target = $region24
        $region23: #{tpu_custom_call.1} parent=11 // pred_region
          _
        $region24: #{tpu_custom_call.1} parent=11 // pred_fallthru
          _
        // Predicated region
        $region25: #{tpu_custom_call.1} parent=11 // pred_check
          %p322 = pneg %p146
        $region26: #{tpu_custom_call.1} parent=11 // pred_check_branch
          %324 = sbr.rel (%p322) target = $region28
        $region27: #{tpu_custom_call.1} parent=11 // pred_region
          _
        $region28: #{tpu_custom_call.1} parent=11 // pred_fallthru
          _
        // Predicated region
        $region29: #{tpu_custom_call.1} parent=11 // pred_check
          %p325 = pneg %p167
        $region30: #{tpu_custom_call.1} parent=11 // pred_check_branch
          %327 = sbr.rel (%p325) target = $region32
        $region31: #{tpu_custom_call.1} parent=11 // pred_region
          %s329 = ssub.s32 512, 512
          %330 = vsyncadd [#allocation3], %s329
          %s331 = sshll.u32 [#allocation2], 4
          %s332 = int_to_ptr.vmem [resolvable:$true] %s331
          %337 = dma.hbm_to_vmem [thread:$0]  %s5, 512, %s332, [#allocation3], 64, 64, 4
        $region32: #{tpu_custom_call.1} parent=11 // pred_fallthru
          _
        // Predicated region
        $region33: #{tpu_custom_call.1} parent=11 // pred_check
          %p338 = pneg %p188
        $region34: #{tpu_custom_call.1} parent=11 // pred_check_branch
          %340 = sbr.rel (%p338) target = $region36
        $region35: #{tpu_custom_call.1} parent=11 // pred_region
          _
        $region36: #{tpu_custom_call.1} parent=11 // pred_fallthru
          _
        // Predicated region
        $region37: #{tpu_custom_call.1} parent=11 // pred_check
          %p341 = pneg %p209
        $region38: #{tpu_custom_call.1} parent=11 // pred_check_branch
          %343 = sbr.rel (%p341) target = $region40
        $region39: #{tpu_custom_call.1} parent=11 // pred_region
          %s345 = ssub.s32 512, 512
          %346 = vsyncadd [#allocation6], %s345
          %s347 = sshll.u32 [#allocation5], 4
          %s348 = int_to_ptr.vmem [resolvable:$true] %s347
          %353 = dma.hbm_to_vmem [thread:$0]  %s7, 512, %s348, [#allocation6], 64, 64, 4
        $region40: #{tpu_custom_call.1} parent=11 // pred_fallthru
          _
        // Predicated region
        $region41: #{tpu_custom_call.1} parent=11 // pred_check
          %p354 = pneg %p230
        $region42: #{tpu_custom_call.1} parent=11 // pred_check_branch
          %356 = sbr.rel (%p354) target = $region44
        $region43: #{tpu_custom_call.1} parent=11 // pred_region
          _
        $region44: #{tpu_custom_call.1} parent=11 // pred_fallthru
          _
        // Predicated region
        $region45: #{tpu_custom_call.1} parent=11 // pred_check
          %p357 = pneg %p251
        $region46: #{tpu_custom_call.1} parent=11 // pred_check_branch
          %359 = sbr.rel (%p357) target = $region48
        $region47: #{tpu_custom_call.1} parent=11 // pred_region
          %s361 = ssub.s32 8192, 8192
          %362 = vsyncadd [#allocation6], %s361
          %s363 = sshll.u32 [#allocation7], 4
          %s364 = int_to_ptr.vmem [resolvable:$true] %s363
          %369 = dma.hbm_to_vmem [thread:$0]  %s9, 8192, %s364, [#allocation6], 512, 512, 32
        $region48: #{tpu_custom_call.1} parent=11 // pred_fallthru
          _
        // Predicated region
        $region49: #{tpu_custom_call.1} parent=11 // pred_check
          %p370 = pneg %p272
        $region50: #{tpu_custom_call.1} parent=11 // pred_check_branch
          %372 = sbr.rel (%p370) target = $region52
        $region51: #{tpu_custom_call.1} parent=11 // pred_region
          _
        $region52: #{tpu_custom_call.1} parent=11 // pred_fallthru
          _
      $region12: #{tpu_custom_call.1} parent=5 // pred_fallthru
        _
      %p373 = scmp.lt.s32.totalorder %s22, 2
      // Predicated region
      $region53: #{tpu_custom_call.1} parent=5 // pred_check
        %p374 = pneg %p373
      $region54: #{tpu_custom_call.1} parent=5 // pred_check_branch
        %376 = sbr.rel (%p374) target = $region56
      $region55: #{tpu_custom_call.1} parent=5 // pred_region
        // Predicated region
        $region57: #{tpu_custom_call.1} parent=55 // pred_check
          %p377 = pneg %p56
        $region58: #{tpu_custom_call.1} parent=55 // pred_check_branch
          %379 = sbr.rel (%p377) target = $region60
        $region59: #{tpu_custom_call.1} parent=55 // pred_region
          %s380 = smul.u32 2, %s30
          %p381 = scmp.lt.s32.totalorder %s29, 1
          %s382 = scalar_select %p381, %s29, 1
          %p383 = scmp.lt.s32.totalorder %s380, 1
          %s384 = scalar_select %p383, %s380, 1
          %s385 = smul.addr %s382, 2
          %s386 = sadd.s32 %s384, %s385
          %s387 = smul.addr %s386, 8
          %s388 = scalar_lea.vmem %s0, %s387
          %s389 = smul.u32 2, %s30
        $region60: #{tpu_custom_call.1} parent=55 // pred_fallthru
          _
      $region56: #{tpu_custom_call.1} parent=5 // pred_fallthru
        _
      %p390 = scmp.le.s32.totalorder 1, %s22
      %p391 = scmp.lt.s32.totalorder %s22, 3
      %p392 = pnand %p390, %p391
      %p393 = pneg %p392
      // Predicated region
      $region61: #{tpu_custom_call.1} parent=5 // pred_check
        _
      $region62: #{tpu_custom_call.1} parent=5 // pred_check_branch
        %395 = sbr.rel (%p392) target = $region64
      $region63: #{tpu_custom_call.1} parent=5 // pred_region
        %s396 = ssub.s32 %s22, 1
        // Predicated region
        $region65: #{tpu_custom_call.1} parent=63 // pred_check
          %p397 = pneg %p167
        $region66: #{tpu_custom_call.1} parent=63 // pred_check_branch
          %399 = sbr.rel (%p397) target = $region68
        $region67: #{tpu_custom_call.1} parent=63 // pred_region
          %400 = dma.done [#allocation3], 512
        $region68: #{tpu_custom_call.1} parent=63 // pred_fallthru
          _
        // Predicated region
        $region69: #{tpu_custom_call.1} parent=63 // pred_check
          %p401 = pneg %p209
        $region70: #{tpu_custom_call.1} parent=63 // pred_check_branch
          %403 = sbr.rel (%p401) target = $region72
        $region71: #{tpu_custom_call.1} parent=63 // pred_region
          %404 = dma.done [#allocation6], 512
        $region72: #{tpu_custom_call.1} parent=63 // pred_fallthru
          _
        // Predicated region
        $region73: #{tpu_custom_call.1} parent=63 // pred_check
          %p405 = pneg %p251
        $region74: #{tpu_custom_call.1} parent=63 // pred_check_branch
          %407 = sbr.rel (%p405) target = $region76
        $region75: #{tpu_custom_call.1} parent=63 // pred_region
          %408 = dma.done [#allocation6], 8192
        $region76: #{tpu_custom_call.1} parent=63 // pred_fallthru
          _
        %s409 = smul.u32 2, %s32
        %p410 = scmp.lt.s32.totalorder %s31, 1
        %s411 = scalar_select %p410, %s31, 1
        %p412 = scmp.lt.s32.totalorder %s409, 1
        %s413 = scalar_select %p412, %s409, 1
        %s414 = smul.addr %s411, 2
        %s415 = sadd.s32 %s413, %s414
        %s416 = smul.addr %s415, 8
        %s417 = scalar_lea.vmem %s0, %s416
        %p418 = pneg %p62
        %p419 = pneg %p59
        %p420 = pneg %p83
        %p421 = pneg %p80
        %p422 = pneg %p104
        %p423 = pneg %p101
        %p424 = pneg %p125
        %p425 = pneg %p122
        %p426 = pneg %p146
        %p427 = pneg %p143
        %p428 = pneg %p167
        %p429 = pneg %p164
        %p430 = pneg %p188
        %p431 = pneg %p185
        %p432 = pneg %p209
        %p433 = pneg %p206
        %p434 = pneg %p230
        %p435 = pneg %p227
        %p436 = pneg %p251
        %p437 = pneg %p248
        %p438 = pneg %p272
        %p439 = pneg %p269
        %p440 = pneg %p298
        %p441 = pneg %p295
        %s442 = sand.u32 %s285, 1
        %s443 = scalar_lea.sflag [#allocation4], %s442
        %s444 = sand.u32 %s285, 1
        %s445 = smul.addr %s444, 8
        %s446 = scalar_lea.vmem [#allocation8], %s445
        %s447 = smul.u32 2, %s32
        %p448 = scmp.lt.s32.totalorder %s31, 1
        %s449 = scalar_select %p448, %s31, 1
        %p450 = scmp.lt.s32.totalorder %s447, 1
        %s451 = scalar_select %p450, %s447, 1
        %s452 = smul.addr %s449, 2
        %s453 = sadd.s32 %s451, %s452
        %s454 = smul.addr %s453, 8
        %s455 = scalar_lea.vmem %s0, %s454
        %s456 = smul.u32 2, %s32
        %p458 = scmp.eq.s32.totalorder %s32, 0
        // Predicated region
        $region77: #{tpu_custom_call.1} parent=63 // pred_check
          %p459 = pneg %p458
        $region78: #{tpu_custom_call.1} parent=63 // pred_check_branch
          %461 = sbr.rel (%p459) target = $region80
        $region79: #{tpu_custom_call.1} parent=63 // pred_region
          %462 = vst [vmem:[%s446] sm:$0xff] -inf
        $region80: #{tpu_custom_call.1} parent=63 // pred_fallthru
          _
        %v463 = vld [vmem:[%s455] sm:$0xff]
        %v464 = vld [vmem:[%s455 + $0x8] sm:$0xff]
        %v465 = vpack.c.bf16 %v464, %v463
        %v466 = vld [vmem:[%s1] sm:$0xf]
        %v467 = vld [vmem:[%s2] sm:$0x1]
        %v469 = vlaneseq
        %v470 = vshrl.u32 %v469, 7
        %v471 = vsub.s32 0, %v470
        %v472 = vrot.slane %v467, %v471
        %vm474 = vcmask 64512
        %v476 = vsel %vm474, %v465, 0
        %vm478 = vcmask 1043456
        %v480 = vsel %vm478, %v466, 0
        %482 = vmatprep.subr.bf16.mxu0 0
        %483 = vmatpush1.bf16.msra.mxu0 0
        %484 = vmatprep.subr.bf16.mxu0 0
        %485 = vmatpush1.bf16.msra.mxu0 0
        %486 = vmatprep.subr.bf16.mxu0 0
        %487 = vmatpush1.bf16.msra.mxu0 0
        %488 = vmatprep.subr.bf16.mxu0 0
        %489 = vmatpush1.bf16.msra.mxu0 0
        %490 = vmatprep.subr.bf16.mxu0 0
        %491 = vmatpush1.bf16.msra.mxu0 0
        %492 = vmatprep.subr.bf16.mxu0 0
        %493 = vmatpush1.bf16.msra.mxu0 0
        %494 = vmatprep.subr.bf16.mxu0 0
        %495 = vmatpush1.bf16.msra.mxu0 0
        %496 = vmatprep.subr.bf16.mxu0 0
        %497 = vmatpush1.bf16.msra.mxu0 %v480
        %498 = vmatprep.subr.bf16.mxu0 0
        %499 = vmatpush2.bf16.msra.mxu0 0
        %500 = vmatprep.subr.bf16.mxu0 0
        %501 = vmatpush2.bf16.msra.mxu0 0
        %502 = vmatprep.subr.bf16.mxu0 0
        %503 = vmatpush2.bf16.msra.mxu0 0
        %504 = vmatprep.subr.bf16.mxu0 0
        %505 = vmatpush2.bf16.msra.mxu0 0
        %506 = vmatprep.subr.bf16.mxu0 0
        %507 = vmatpush2.bf16.msra.mxu0 0
        %508 = vmatprep.subr.bf16.mxu0 0
        %509 = vmatpush2.bf16.msra.mxu0 0
        %510 = vmatprep.subr.bf16.mxu0 0
        %511 = vmatpush2.bf16.msra.mxu0 0
        %512 = vmatprep.subr.bf16.mxu0 0
        %513 = vmatpush2.bf16.msra.mxu0 0
        %514 = vmatprep.mubr.bf16.mxu0 0
        %515 = vmatmul.mubr.bf16.gmra.mxu0 %v476
        %v516 = vpop.f32.mrf.mxu0
        %v517 = vadd.f32 %v472, %v516
        %v518 = vpop.f32.mrf.mxu0
        %v519 = vpop.f32.mrf.mxu0
        %v520 = vadd.f32 %v472, %v519
        %v521 = vpop.f32.mrf.mxu0
        %522 = vdwg.mxu0
        %v523 = vmax.f32 %v517, 0.0
        %v524 = vmax.f32 %v520, 0.0
        %v525 = vpack.c.bf16 %v524, %v523
        %v526 = vld [vmem:[%s3] sm:$0xf]
        %v527 = vld [vmem:[%s3 + $0x4] sm:$0xf]
        %v528 = vld [vmem:[%s3 + $0x8] sm:$0xf]
        %v529 = vld [vmem:[%s3 + $0xc] sm:$0xf]
        %v530 = vld [vmem:[%s3 + $0x10] sm:$0xf]
        %v531 = vld [vmem:[%s3 + $0x14] sm:$0xf]
        %v532 = vld [vmem:[%s3 + $0x18] sm:$0xf]
        %v533 = vld [vmem:[%s3 + $0x1c] sm:$0xf]
        %v534 = vld [vmem:[%s4] sm:$0x1]
        %v536 = vlaneseq
        %v537 = vshrl.u32 %v536, 7
        %v538 = vsub.s32 0, %v537
        %v539 = vrot.slane %v534, %v538
        %v549 = vunpack.c.l.b16 %v526
        %v550 = vunpack.c.l.b16 %v527
        %v551 = vunpack.c.l.b16 %v528
        %v552 = vunpack.c.l.b16 %v529
        %v553 = vunpack.c.l.b16 %v530
        %v554 = vunpack.c.l.b16 %v531
        %v555 = vunpack.c.l.b16 %v532
        %v556 = vunpack.c.l.b16 %v533
        %v557 = vpack.c.b16 %v550, %v549
        %v558 = vpack.c.b16 %v552, %v551
        %v559 = vpack.c.b16 %v554, %v553
        %v560 = vpack.c.b16 %v556, %v555
        %vm565 = vcmask 523264
        %v567 = vsel %vm565, %v525, 0
        %569 = vmatprep.subr.bf16.mxu0 0
        %570 = vmatpush1.bf16.msra.mxu0 0
        %571 = vmatprep.subr.bf16.mxu0 0
        %572 = vmatpush1.bf16.msra.mxu0 0
        %573 = vmatprep.subr.bf16.mxu0 0
        %574 = vmatpush1.bf16.msra.mxu0 0
        %575 = vmatprep.subr.bf16.mxu0 0
        %576 = vmatpush1.bf16.msra.mxu0 0
        %577 = vmatprep.subr.bf16.mxu0 0
        %578 = vmatpush1.bf16.msra.mxu0 %v560
        %579 = vmatprep.subr.bf16.mxu0 0
        %580 = vmatpush1.bf16.msra.mxu0 %v559
        %581 = vmatprep.subr.bf16.mxu0 0
        %582 = vmatpush1.bf16.msra.mxu0 %v558
        %583 = vmatprep.subr.bf16.mxu0 0
        %584 = vmatpush1.bf16.msra.mxu0 %v557
        %585 = vmatprep.subr.bf16.mxu0 0
        %586 = vmatpush2.bf16.msra.mxu0 0
        %587 = vmatprep.subr.bf16.mxu0 0
        %588 = vmatpush2.bf16.msra.mxu0 0
        %589 = vmatprep.subr.bf16.mxu0 0
        %590 = vmatpush2.bf16.msra.mxu0 0
        %591 = vmatprep.subr.bf16.mxu0 0
        %592 = vmatpush2.bf16.msra.mxu0 0
        %593 = vmatprep.subr.bf16.mxu0 0
        %594 = vmatpush2.bf16.msra.mxu0 0
        %595 = vmatprep.subr.bf16.mxu0 0
        %596 = vmatpush2.bf16.msra.mxu0 0
        %597 = vmatprep.subr.bf16.mxu0 0
        %598 = vmatpush2.bf16.msra.mxu0 0
        %599 = vmatprep.subr.bf16.mxu0 0
        %600 = vmatpush2.bf16.msra.mxu0 0
        %601 = vmatprep.mubr.bf16.mxu0 0
        %602 = vmatmul.mubr.bf16.gmra.mxu0 %v567
        %v603 = vpop.f32.mrf.mxu0
        %v604 = vadd.f32 %v539, %v603
        %v605 = vpop.f32.mrf.mxu0
        %v606 = vpop.f32.mrf.mxu0
        %v607 = vadd.f32 %v539, %v606
        %v608 = vpop.f32.mrf.mxu0
        %609 = vdwg.mxu0
        %v610 = vmax.f32 %v604, 0.0
        %v611 = vmax.f32 %v607, 0.0
        %v612 = vpack.c.bf16 %v611, %v610
        %v613 = vld [vmem:[#allocation2] sm:$0xf]
        %v614 = vld [vmem:[#allocation2 + $0x4] sm:$0xf]
        %v615 = vld [vmem:[#allocation2 + $0x8] sm:$0xf]
        %v616 = vld [vmem:[#allocation2 + $0xc] sm:$0xf]
        %v617 = vld [vmem:[#allocation2 + $0x10] sm:$0xf]
        %v618 = vld [vmem:[#allocation2 + $0x14] sm:$0xf]
        %v619 = vld [vmem:[#allocation2 + $0x18] sm:$0xf]
        %v620 = vld [vmem:[#allocation2 + $0x1c] sm:$0xf]
        %v621 = vld [vmem:[%s6] sm:$0x1]
        %v623 = vlaneseq
        %v624 = vshrl.u32 %v623, 7
        %v625 = vsub.s32 0, %v624
        %v626 = vrot.slane %v621, %v625
        %v636 = vunpack.c.l.b16 %v613
        %v637 = vunpack.c.l.b16 %v614
        %v638 = vunpack.c.l.b16 %v615
        %v639 = vunpack.c.l.b16 %v616
        %v640 = vunpack.c.l.b16 %v617
        %v641 = vunpack.c.l.b16 %v618
        %v642 = vunpack.c.l.b16 %v619
        %v643 = vunpack.c.l.b16 %v620
        %v644 = vpack.c.b16 %v637, %v636
        %v645 = vpack.c.b16 %v639, %v638
        %v646 = vpack.c.b16 %v641, %v640
        %v647 = vpack.c.b16 %v643, %v642
        %v653 = vsel %vm565, %v612, 0
        %655 = vmatprep.subr.bf16.mxu0 0
        %656 = vmatpush1.bf16.msra.mxu0 0
        %657 = vmatprep.subr.bf16.mxu0 0
        %658 = vmatpush1.bf16.msra.mxu0 0
        %659 = vmatprep.subr.bf16.mxu0 0
        %660 = vmatpush1.bf16.msra.mxu0 0
        %661 = vmatprep.subr.bf16.mxu0 0
        %662 = vmatpush1.bf16.msra.mxu0 0
        %663 = vmatprep.subr.bf16.mxu0 0
        %664 = vmatpush1.bf16.msra.mxu0 %v647
        %665 = vmatprep.subr.bf16.mxu0 0
        %666 = vmatpush1.bf16.msra.mxu0 %v646
        %667 = vmatprep.subr.bf16.mxu0 0
        %668 = vmatpush1.bf16.msra.mxu0 %v645
        %669 = vmatprep.subr.bf16.mxu0 0
        %670 = vmatpush1.bf16.msra.mxu0 %v644
        %671 = vmatprep.subr.bf16.mxu0 0
        %672 = vmatpush2.bf16.msra.mxu0 0
        %673 = vmatprep.subr.bf16.mxu0 0
        %674 = vmatpush2.bf16.msra.mxu0 0
        %675 = vmatprep.subr.bf16.mxu0 0
        %676 = vmatpush2.bf16.msra.mxu0 0
        %677 = vmatprep.subr.bf16.mxu0 0
        %678 = vmatpush2.bf16.msra.mxu0 0
        %679 = vmatprep.subr.bf16.mxu0 0
        %680 = vmatpush2.bf16.msra.mxu0 0
        %681 = vmatprep.subr.bf16.mxu0 0
        %682 = vmatpush2.bf16.msra.mxu0 0
        %683 = vmatprep.subr.bf16.mxu0 0
        %684 = vmatpush2.bf16.msra.mxu0 0
        %685 = vmatprep.subr.bf16.mxu0 0
        %686 = vmatpush2.bf16.msra.mxu0 0
        %687 = vmatprep.mubr.bf16.mxu0 0
        %688 = vmatmul.mubr.bf16.gmra.mxu0 %v653
        %v689 = vpop.f32.mrf.mxu0
        %v690 = vadd.f32 %v626, %v689
        %v691 = vpop.f32.mrf.mxu0
        %v692 = vpop.f32.mrf.mxu0
        %v693 = vadd.f32 %v626, %v692
        %v694 = vpop.f32.mrf.mxu0
        %695 = vdwg.mxu0
        %v696 = vmax.f32 %v690, 0.0
        %v697 = vmax.f32 %v693, 0.0
        %v698 = vpack.c.bf16 %v697, %v696
        %v699 = vld [vmem:[#allocation5] sm:$0xf]
        %v700 = vld [vmem:[#allocation5 + $0x4] sm:$0xf]
        %v701 = vld [vmem:[#allocation5 + $0x8] sm:$0xf]
        %v702 = vld [vmem:[#allocation5 + $0xc] sm:$0xf]
        %v703 = vld [vmem:[#allocation5 + $0x10] sm:$0xf]
        %v704 = vld [vmem:[#allocation5 + $0x14] sm:$0xf]
        %v705 = vld [vmem:[#allocation5 + $0x18] sm:$0xf]
        %v706 = vld [vmem:[#allocation5 + $0x1c] sm:$0xf]
        %v707 = vld [vmem:[%s8] sm:$0x1]
        %v709 = vlaneseq
        %v710 = vshrl.u32 %v709, 7
        %v711 = vsub.s32 0, %v710
        %v712 = vrot.slane %v707, %v711
        %v722 = vunpack.c.l.b16 %v699
        %v723 = vunpack.c.l.b16 %v700
        %v724 = vunpack.c.l.b16 %v701
        %v725 = vunpack.c.l.b16 %v702
        %v726 = vunpack.c.l.b16 %v703
        %v727 = vunpack.c.l.b16 %v704
        %v728 = vunpack.c.l.b16 %v705
        %v729 = vunpack.c.l.b16 %v706
        %v730 = vpack.c.b16 %v723, %v722
        %v731 = vpack.c.b16 %v725, %v724
        %v732 = vpack.c.b16 %v727, %v726
        %v733 = vpack.c.b16 %v729, %v728
        %v739 = vsel %vm565, %v698, 0
        %741 = vmatprep.subr.bf16.mxu0 0
        %742 = vmatpush1.bf16.msra.mxu0 0
        %743 = vmatprep.subr.bf16.mxu0 0
        %744 = vmatpush1.bf16.msra.mxu0 0
        %745 = vmatprep.subr.bf16.mxu0 0
        %746 = vmatpush1.bf16.msra.mxu0 0
        %747 = vmatprep.subr.bf16.mxu0 0
        %748 = vmatpush1.bf16.msra.mxu0 0
        %749 = vmatprep.subr.bf16.mxu0 0
        %750 = vmatpush1.bf16.msra.mxu0 %v733
        %751 = vmatprep.subr.bf16.mxu0 0
        %752 = vmatpush1.bf16.msra.mxu0 %v732
        %753 = vmatprep.subr.bf16.mxu0 0
        %754 = vmatpush1.bf16.msra.mxu0 %v731
        %755 = vmatprep.subr.bf16.mxu0 0
        %756 = vmatpush1.bf16.msra.mxu0 %v730
        %757 = vmatprep.subr.bf16.mxu0 0
        %758 = vmatpush2.bf16.msra.mxu0 0
        %759 = vmatprep.subr.bf16.mxu0 0
        %760 = vmatpush2.bf16.msra.mxu0 0
        %761 = vmatprep.subr.bf16.mxu0 0
        %762 = vmatpush2.bf16.msra.mxu0 0
        %763 = vmatprep.subr.bf16.mxu0 0
        %764 = vmatpush2.bf16.msra.mxu0 0
        %765 = vmatprep.subr.bf16.mxu0 0
        %766 = vmatpush2.bf16.msra.mxu0 0
        %767 = vmatprep.subr.bf16.mxu0 0
        %768 = vmatpush2.bf16.msra.mxu0 0
        %769 = vmatprep.subr.bf16.mxu0 0
        %770 = vmatpush2.bf16.msra.mxu0 0
        %771 = vmatprep.subr.bf16.mxu0 0
        %772 = vmatpush2.bf16.msra.mxu0 0
        %773 = vmatprep.mubr.bf16.mxu0 0
        %774 = vmatmul.mubr.bf16.gmra.mxu0 %v739
        %v775 = vpop.f32.mrf.mxu0
        %v776 = vadd.f32 %v712, %v775
        %v777 = vpop.f32.mrf.mxu0
        %v778 = vpop.f32.mrf.mxu0
        %v779 = vadd.f32 %v712, %v778
        %v780 = vpop.f32.mrf.mxu0
        %781 = vdwg.mxu0
        %v782 = vmax.f32 %v776, 0.0
        %v783 = vmax.f32 %v779, 0.0
        %v784 = vpack.c.bf16 %v783, %v782
        %v785 = vld [vmem:[#allocation7] sm:$0xff]
        %v786 = vld [vmem:[#allocation7 + $0x8] sm:$0xff]
        %v787 = vld [vmem:[#allocation7 + $0x10] sm:$0xff]
        %v788 = vld [vmem:[#allocation7 + $0x18] sm:$0xff]
        %v789 = vld [vmem:[#allocation7 + $0x20] sm:$0xff]
        %v790 = vld [vmem:[#allocation7 + $0x28] sm:$0xff]
        %v791 = vld [vmem:[#allocation7 + $0x30] sm:$0xff]
        %v792 = vld [vmem:[#allocation7 + $0x38] sm:$0xff]
        %v793 = vld [vmem:[#allocation7 + $0x40] sm:$0xff]
        %v794 = vld [vmem:[#allocation7 + $0x48] sm:$0xff]
        %v795 = vld [vmem:[#allocation7 + $0x50] sm:$0xff]
        %v796 = vld [vmem:[#allocation7 + $0x58] sm:$0xff]
        %v797 = vld [vmem:[#allocation7 + $0x60] sm:$0xff]
        %v798 = vld [vmem:[#allocation7 + $0x68] sm:$0xff]
        %v799 = vld [vmem:[#allocation7 + $0x70] sm:$0xff]
        %v800 = vld [vmem:[#allocation7 + $0x78] sm:$0xff]
        %v801 = vld [vmem:[#allocation7 + $0x80] sm:$0xff]
        %v802 = vld [vmem:[#allocation7 + $0x88] sm:$0xff]
        %v803 = vld [vmem:[#allocation7 + $0x90] sm:$0xff]
        %v804 = vld [vmem:[#allocation7 + $0x98] sm:$0xff]
        %v805 = vld [vmem:[#allocation7 + $0xa0] sm:$0xff]
        %v806 = vld [vmem:[#allocation7 + $0xa8] sm:$0xff]
        %v807 = vld [vmem:[#allocation7 + $0xb0] sm:$0xff]
        %v808 = vld [vmem:[#allocation7 + $0xb8] sm:$0xff]
        %v809 = vld [vmem:[#allocation7 + $0xc0] sm:$0xff]
        %v810 = vld [vmem:[#allocation7 + $0xc8] sm:$0xff]
        %v811 = vld [vmem:[#allocation7 + $0xd0] sm:$0xff]
        %v812 = vld [vmem:[#allocation7 + $0xd8] sm:$0xff]
        %v813 = vld [vmem:[#allocation7 + $0xe0] sm:$0xff]
        %v814 = vld [vmem:[#allocation7 + $0xe8] sm:$0xff]
        %v815 = vld [vmem:[#allocation7 + $0xf0] sm:$0xff]
        %v816 = vld [vmem:[#allocation7 + $0xf8] sm:$0xff]
        %v817 = vld [vmem:[#allocation7 + $0x100] sm:$0xff]
        %v818 = vld [vmem:[#allocation7 + $0x108] sm:$0xff]
        %v819 = vld [vmem:[#allocation7 + $0x110] sm:$0xff]
        %v820 = vld [vmem:[#allocation7 + $0x118] sm:$0xff]
        %v821 = vld [vmem:[#allocation7 + $0x120] sm:$0xff]
        %v822 = vld [vmem:[#allocation7 + $0x128] sm:$0xff]
        %v823 = vld [vmem:[#allocation7 + $0x130] sm:$0xff]
        %v824 = vld [vmem:[#allocation7 + $0x138] sm:$0xff]
        %v825 = vld [vmem:[#allocation7 + $0x140] sm:$0xff]
        %v826 = vld [vmem:[#allocation7 + $0x148] sm:$0xff]
        %v827 = vld [vmem:[#allocation7 + $0x150] sm:$0xff]
        %v828 = vld [vmem:[#allocation7 + $0x158] sm:$0xff]
        %v829 = vld [vmem:[#allocation7 + $0x160] sm:$0xff]
        %v830 = vld [vmem:[#allocation7 + $0x168] sm:$0xff]
        %v831 = vld [vmem:[#allocation7 + $0x170] sm:$0xff]
        %v832 = vld [vmem:[#allocation7 + $0x178] sm:$0xff]
        %v833 = vld [vmem:[#allocation7 + $0x180] sm:$0xff]
        %v834 = vld [vmem:[#allocation7 + $0x188] sm:$0xff]
        %v835 = vld [vmem:[#allocation7 + $0x190] sm:$0xff]
        %v836 = vld [vmem:[#allocation7 + $0x198] sm:$0xff]
        %v837 = vld [vmem:[#allocation7 + $0x1a0] sm:$0xff]
        %v838 = vld [vmem:[#allocation7 + $0x1a8] sm:$0xff]
        %v839 = vld [vmem:[#allocation7 + $0x1b0] sm:$0xff]
        %v840 = vld [vmem:[#allocation7 + $0x1b8] sm:$0xff]
        %v841 = vld [vmem:[#allocation7 + $0x1c0] sm:$0xff]
        %v842 = vld [vmem:[#allocation7 + $0x1c8] sm:$0xff]
        %v843 = vld [vmem:[#allocation7 + $0x1d0] sm:$0xff]
        %v844 = vld [vmem:[#allocation7 + $0x1d8] sm:$0xff]
        %v845 = vld [vmem:[#allocation7 + $0x1e0] sm:$0xff]
        %v846 = vld [vmem:[#allocation7 + $0x1e8] sm:$0xff]
        %v847 = vld [vmem:[#allocation7 + $0x1f0] sm:$0xff]
        %v848 = vld [vmem:[#allocation7 + $0x1f8] sm:$0xff]
        %v849 = vld [vmem:[%s10] sm:$0xff]
        %v851 = vlaneseq
        %v852 = vshrl.u32 %v851, 7
        %v853 = vsub.s32 0, %v852
        %v854 = vrot.slane %v849, %v853
        %v855 = vlaneseq
        %v856 = vshrl.u32 %v855, 7
        %v857 = vsub.s32 1, %v856
        %v858 = vrot.slane %v849, %v857
        %v859 = vlaneseq
        %v860 = vshrl.u32 %v859, 7
        %v861 = vsub.s32 2, %v860
        %v862 = vrot.slane %v849, %v861
        %v863 = vlaneseq
        %v864 = vshrl.u32 %v863, 7
        %v865 = vsub.s32 3, %v864
        %v866 = vrot.slane %v849, %v865
        %v867 = vlaneseq
        %v868 = vshrl.u32 %v867, 7
        %v869 = vsub.s32 4, %v868
        %v870 = vrot.slane %v849, %v869
        %v871 = vlaneseq
        %v872 = vshrl.u32 %v871, 7
        %v873 = vsub.s32 5, %v872
        %v874 = vrot.slane %v849, %v873
        %v875 = vlaneseq
        %v876 = vshrl.u32 %v875, 7
        %v877 = vsub.s32 6, %v876
        %v878 = vrot.slane %v849, %v877
        %v879 = vlaneseq
        %v880 = vshrl.u32 %v879, 7
        %v881 = vsub.s32 7, %v880
        %v882 = vrot.slane %v849, %v881
        %v955 = vunpack.c.l.b16 %v785
        %v956 = vunpack.c.h.b16 %v785
        %v957 = vunpack.c.l.b16 %v786
        %v958 = vunpack.c.h.b16 %v786
        %v959 = vunpack.c.l.b16 %v787
        %v960 = vunpack.c.h.b16 %v787
        %v961 = vunpack.c.l.b16 %v788
        %v962 = vunpack.c.h.b16 %v788
        %v963 = vunpack.c.l.b16 %v789
        %v964 = vunpack.c.h.b16 %v789
        %v965 = vunpack.c.l.b16 %v790
        %v966 = vunpack.c.h.b16 %v790
        %v967 = vunpack.c.l.b16 %v791
        %v968 = vunpack.c.h.b16 %v791
        %v969 = vunpack.c.l.b16 %v792
        %v970 = vunpack.c.h.b16 %v792
        %v971 = vunpack.c.l.b16 %v793
        %v972 = vunpack.c.h.b16 %v793
        %v973 = vunpack.c.l.b16 %v794
        %v974 = vunpack.c.h.b16 %v794
        %v975 = vunpack.c.l.b16 %v795
        %v976 = vunpack.c.h.b16 %v795
        %v977 = vunpack.c.l.b16 %v796
        %v978 = vunpack.c.h.b16 %v796
        %v979 = vunpack.c.l.b16 %v797
        %v980 = vunpack.c.h.b16 %v797
        %v981 = vunpack.c.l.b16 %v798
        %v982 = vunpack.c.h.b16 %v798
        %v983 = vunpack.c.l.b16 %v799
        %v984 = vunpack.c.h.b16 %v799
        %v985 = vunpack.c.l.b16 %v800
        %v986 = vunpack.c.h.b16 %v800
        %v987 = vunpack.c.l.b16 %v801
        %v988 = vunpack.c.h.b16 %v801
        %v989 = vunpack.c.l.b16 %v802
        %v990 = vunpack.c.h.b16 %v802
        %v991 = vunpack.c.l.b16 %v803
        %v992 = vunpack.c.h.b16 %v803
        %v993 = vunpack.c.l.b16 %v804
        %v994 = vunpack.c.h.b16 %v804
        %v995 = vunpack.c.l.b16 %v805
        %v996 = vunpack.c.h.b16 %v805
        %v997 = vunpack.c.l.b16 %v806
        %v998 = vunpack.c.h.b16 %v806
        %v999 = vunpack.c.l.b16 %v807
        %v1000 = vunpack.c.h.b16 %v807
        %v1001 = vunpack.c.l.b16 %v808
        %v1002 = vunpack.c.h.b16 %v808
        %v1003 = vunpack.c.l.b16 %v809
        %v1004 = vunpack.c.h.b16 %v809
        %v1005 = vunpack.c.l.b16 %v810
        %v1006 = vunpack.c.h.b16 %v810
        %v1007 = vunpack.c.l.b16 %v811
        %v1008 = vunpack.c.h.b16 %v811
        %v1009 = vunpack.c.l.b16 %v812
        %v1010 = vunpack.c.h.b16 %v812
        %v1011 = vunpack.c.l.b16 %v813
        %v1012 = vunpack.c.h.b16 %v813
        %v1013 = vunpack.c.l.b16 %v814
        %v1014 = vunpack.c.h.b16 %v814
        %v1015 = vunpack.c.l.b16 %v815
        %v1016 = vunpack.c.h.b16 %v815
        %v1017 = vunpack.c.l.b16 %v816
        %v1018 = vunpack.c.h.b16 %v816
        %v1019 = vunpack.c.l.b16 %v817
        %v1020 = vunpack.c.h.b16 %v817
        %v1021 = vunpack.c.l.b16 %v818
        %v1022 = vunpack.c.h.b16 %v818
        %v1023 = vunpack.c.l.b16 %v819
        %v1024 = vunpack.c.h.b16 %v819
        %v1025 = vunpack.c.l.b16 %v820
        %v1026 = vunpack.c.h.b16 %v820
        %v1027 = vunpack.c.l.b16 %v821
        %v1028 = vunpack.c.h.b16 %v821
        %v1029 = vunpack.c.l.b16 %v822
        %v1030 = vunpack.c.h.b16 %v822
        %v1031 = vunpack.c.l.b16 %v823
        %v1032 = vunpack.c.h.b16 %v823
        %v1033 = vunpack.c.l.b16 %v824
        %v1034 = vunpack.c.h.b16 %v824
        %v1035 = vunpack.c.l.b16 %v825
        %v1036 = vunpack.c.h.b16 %v825
        %v1037 = vunpack.c.l.b16 %v826
        %v1038 = vunpack.c.h.b16 %v826
        %v1039 = vunpack.c.l.b16 %v827
        %v1040 = vunpack.c.h.b16 %v827
        %v1041 = vunpack.c.l.b16 %v828
        %v1042 = vunpack.c.h.b16 %v828
        %v1043 = vunpack.c.l.b16 %v829
        %v1044 = vunpack.c.h.b16 %v829
        %v1045 = vunpack.c.l.b16 %v830
        %v1046 = vunpack.c.h.b16 %v830
        %v1047 = vunpack.c.l.b16 %v831
        %v1048 = vunpack.c.h.b16 %v831
        %v1049 = vunpack.c.l.b16 %v832
        %v1050 = vunpack.c.h.b16 %v832
        %v1051 = vunpack.c.l.b16 %v833
        %v1052 = vunpack.c.h.b16 %v833
        %v1053 = vunpack.c.l.b16 %v834
        %v1054 = vunpack.c.h.b16 %v834
        %v1055 = vunpack.c.l.b16 %v835
        %v1056 = vunpack.c.h.b16 %v835
        %v1057 = vunpack.c.l.b16 %v836
        %v1058 = vunpack.c.h.b16 %v836
        %v1059 = vunpack.c.l.b16 %v837
        %v1060 = vunpack.c.h.b16 %v837
        %v1061 = vunpack.c.l.b16 %v838
        %v1062 = vunpack.c.h.b16 %v838
        %v1063 = vunpack.c.l.b16 %v839
        %v1064 = vunpack.c.h.b16 %v839
        %v1065 = vunpack.c.l.b16 %v840
        %v1066 = vunpack.c.h.b16 %v840
        %v1067 = vunpack.c.l.b16 %v841
        %v1068 = vunpack.c.h.b16 %v841
        %v1069 = vunpack.c.l.b16 %v842
        %v1070 = vunpack.c.h.b16 %v842
        %v1071 = vunpack.c.l.b16 %v843
        %v1072 = vunpack.c.h.b16 %v843
        %v1073 = vunpack.c.l.b16 %v844
        %v1074 = vunpack.c.h.b16 %v844
        %v1075 = vunpack.c.l.b16 %v845
        %v1076 = vunpack.c.h.b16 %v845
        %v1077 = vunpack.c.l.b16 %v846
        %v1078 = vunpack.c.h.b16 %v846
        %v1079 = vunpack.c.l.b16 %v847
        %v1080 = vunpack.c.h.b16 %v847
        %v1081 = vunpack.c.l.b16 %v848
        %v1082 = vunpack.c.h.b16 %v848
        %v1083 = vpack.c.b16 %v963, %v955
        %v1084 = vpack.c.b16 %v964, %v956
        %v1085 = vpack.c.b16 %v965, %v957
        %v1086 = vpack.c.b16 %v966, %v958
        %v1087 = vpack.c.b16 %v967, %v959
        %v1088 = vpack.c.b16 %v968, %v960
        %v1089 = vpack.c.b16 %v969, %v961
        %v1090 = vpack.c.b16 %v970, %v962
        %v1091 = vpack.c.b16 %v979, %v971
        %v1092 = vpack.c.b16 %v980, %v972
        %v1093 = vpack.c.b16 %v981, %v973
        %v1094 = vpack.c.b16 %v982, %v974
        %v1095 = vpack.c.b16 %v983, %v975
        %v1096 = vpack.c.b16 %v984, %v976
        %v1097 = vpack.c.b16 %v985, %v977
        %v1098 = vpack.c.b16 %v986, %v978
        %v1099 = vpack.c.b16 %v995, %v987
        %v1100 = vpack.c.b16 %v996, %v988
        %v1101 = vpack.c.b16 %v997, %v989
        %v1102 = vpack.c.b16 %v998, %v990
        %v1103 = vpack.c.b16 %v999, %v991
        %v1104 = vpack.c.b16 %v1000, %v992
        %v1105 = vpack.c.b16 %v1001, %v993
        %v1106 = vpack.c.b16 %v1002, %v994
        %v1107 = vpack.c.b16 %v1011, %v1003
        %v1108 = vpack.c.b16 %v1012, %v1004
        %v1109 = vpack.c.b16 %v1013, %v1005
        %v1110 = vpack.c.b16 %v1014, %v1006
        %v1111 = vpack.c.b16 %v1015, %v1007
        %v1112 = vpack.c.b16 %v1016, %v1008
        %v1113 = vpack.c.b16 %v1017, %v1009
        %v1114 = vpack.c.b16 %v1018, %v1010
        %v1115 = vpack.c.b16 %v1027, %v1019
        %v1116 = vpack.c.b16 %v1028, %v1020
        %v1117 = vpack.c.b16 %v1029, %v1021
        %v1118 = vpack.c.b16 %v1030, %v1022
        %v1119 = vpack.c.b16 %v1031, %v1023
        %v1120 = vpack.c.b16 %v1032, %v1024
        %v1121 = vpack.c.b16 %v1033, %v1025
        %v1122 = vpack.c.b16 %v1034, %v1026
        %v1123 = vpack.c.b16 %v1043, %v1035
        %v1124 = vpack.c.b16 %v1044, %v1036
        %v1125 = vpack.c.b16 %v1045, %v1037
        %v1126 = vpack.c.b16 %v1046, %v1038
        %v1127 = vpack.c.b16 %v1047, %v1039
        %v1128 = vpack.c.b16 %v1048, %v1040
        %v1129 = vpack.c.b16 %v1049, %v1041
        %v1130 = vpack.c.b16 %v1050, %v1042
        %v1131 = vpack.c.b16 %v1059, %v1051
        %v1132 = vpack.c.b16 %v1060, %v1052
        %v1133 = vpack.c.b16 %v1061, %v1053
        %v1134 = vpack.c.b16 %v1062, %v1054
        %v1135 = vpack.c.b16 %v1063, %v1055
        %v1136 = vpack.c.b16 %v1064, %v1056
        %v1137 = vpack.c.b16 %v1065, %v1057
        %v1138 = vpack.c.b16 %v1066, %v1058
        %v1139 = vpack.c.b16 %v1075, %v1067
        %v1140 = vpack.c.b16 %v1076, %v1068
        %v1141 = vpack.c.b16 %v1077, %v1069
        %v1142 = vpack.c.b16 %v1078, %v1070
        %v1143 = vpack.c.b16 %v1079, %v1071
        %v1144 = vpack.c.b16 %v1080, %v1072
        %v1145 = vpack.c.b16 %v1081, %v1073
        %v1146 = vpack.c.b16 %v1082, %v1074
        %1211 = vmatprep.subr.bf16.mxu0 %v1140
        %1212 = vmatpush1.bf16.msra.mxu0 %v1139
        %1213 = vmatprep.subr.bf16.mxu0 %v1132
        %1214 = vmatpush1.bf16.msra.mxu0 %v1131
        %1215 = vmatprep.subr.bf16.mxu0 %v1124
        %1216 = vmatpush1.bf16.msra.mxu0 %v1123
        %1217 = vmatprep.subr.bf16.mxu0 %v1116
        %1218 = vmatpush1.bf16.msra.mxu0 %v1115
        %1219 = vmatprep.subr.bf16.mxu0 %v1108
        %1220 = vmatpush1.bf16.msra.mxu0 %v1107
        %1221 = vmatprep.subr.bf16.mxu0 %v1100
        %1222 = vmatpush1.bf16.msra.mxu0 %v1099
        %1223 = vmatprep.subr.bf16.mxu0 %v1092
        %1224 = vmatpush1.bf16.msra.mxu0 %v1091
        %1225 = vmatprep.subr.bf16.mxu0 %v1084
        %1226 = vmatpush1.bf16.msra.mxu0 %v1083
        %1227 = vmatprep.subr.bf16.mxu0 0
        %1228 = vmatpush2.bf16.msra.mxu0 0
        %1229 = vmatprep.subr.bf16.mxu0 0
        %1230 = vmatpush2.bf16.msra.mxu0 0
        %1231 = vmatprep.subr.bf16.mxu0 0
        %1232 = vmatpush2.bf16.msra.mxu0 0
        %1233 = vmatprep.subr.bf16.mxu0 0
        %1234 = vmatpush2.bf16.msra.mxu0 0
        %1235 = vmatprep.subr.bf16.mxu0 0
        %1236 = vmatpush2.bf16.msra.mxu0 0
        %1237 = vmatprep.subr.bf16.mxu0 0
        %1238 = vmatpush2.bf16.msra.mxu0 0
        %1239 = vmatprep.subr.bf16.mxu0 0
        %1240 = vmatpush2.bf16.msra.mxu0 0
        %1241 = vmatprep.subr.bf16.mxu0 0
        %1242 = vmatpush2.bf16.msra.mxu0 0
        %1243 = vmatprep.mubr.bf16.mxu0 0
        %1244 = vmatmul.mubr.bf16.gmra.mxu0 %v784
        %v1245 = vpop.f32.mrf.mxu0
        %v1246 = vadd.f32 %v854, %v1245
        %v1247 = vpop.f32.mrf.mxu0
        %v1248 = vadd.f32 %v858, %v1247
        %v1249 = vpop.f32.mrf.mxu0
        %v1250 = vadd.f32 %v854, %v1249
        %v1251 = vpop.f32.mrf.mxu0
        %v1252 = vadd.f32 %v858, %v1251
        %1253 = vdwg.mxu0
        %1254 = vmatprep.subr.bf16.mxu0 %v1142
        %1255 = vmatpush1.bf16.msra.mxu0 %v1141
        %1256 = vmatprep.subr.bf16.mxu0 %v1134
        %1257 = vmatpush1.bf16.msra.mxu0 %v1133
        %1258 = vmatprep.subr.bf16.mxu0 %v1126
        %1259 = vmatpush1.bf16.msra.mxu0 %v1125
        %1260 = vmatprep.subr.bf16.mxu0 %v1118
        %1261 = vmatpush1.bf16.msra.mxu0 %v1117
        %1262 = vmatprep.subr.bf16.mxu0 %v1110
        %1263 = vmatpush1.bf16.msra.mxu0 %v1109
        %1264 = vmatprep.subr.bf16.mxu0 %v1102
        %1265 = vmatpush1.bf16.msra.mxu0 %v1101
        %1266 = vmatprep.subr.bf16.mxu0 %v1094
        %1267 = vmatpush1.bf16.msra.mxu0 %v1093
        %1268 = vmatprep.subr.bf16.mxu0 %v1086
        %1269 = vmatpush1.bf16.msra.mxu0 %v1085
        %1270 = vmatprep.subr.bf16.mxu0 0
        %1271 = vmatpush2.bf16.msra.mxu0 0
        %1272 = vmatprep.subr.bf16.mxu0 0
        %1273 = vmatpush2.bf16.msra.mxu0 0
        %1274 = vmatprep.subr.bf16.mxu0 0
        %1275 = vmatpush2.bf16.msra.mxu0 0
        %1276 = vmatprep.subr.bf16.mxu0 0
        %1277 = vmatpush2.bf16.msra.mxu0 0
        %1278 = vmatprep.subr.bf16.mxu0 0
        %1279 = vmatpush2.bf16.msra.mxu0 0
        %1280 = vmatprep.subr.bf16.mxu0 0
        %1281 = vmatpush2.bf16.msra.mxu0 0
        %1282 = vmatprep.subr.bf16.mxu0 0
        %1283 = vmatpush2.bf16.msra.mxu0 0
        %1284 = vmatprep.subr.bf16.mxu0 0
        %1285 = vmatpush2.bf16.msra.mxu0 0
        %1286 = vmatprep.mubr.bf16.mxu0 0
        %1287 = vmatmul.mubr.bf16.gmra.mxu0 %v784
        %v1288 = vpop.f32.mrf.mxu0
        %v1289 = vadd.f32 %v862, %v1288
        %v1290 = vpop.f32.mrf.mxu0
        %v1291 = vadd.f32 %v866, %v1290
        %v1292 = vpop.f32.mrf.mxu0
        %v1293 = vadd.f32 %v862, %v1292
        %v1294 = vpop.f32.mrf.mxu0
        %v1295 = vadd.f32 %v866, %v1294
        %1296 = vdwg.mxu0
        %1297 = vmatprep.subr.bf16.mxu0 %v1144
        %1298 = vmatpush1.bf16.msra.mxu0 %v1143
        %1299 = vmatprep.subr.bf16.mxu0 %v1136
        %1300 = vmatpush1.bf16.msra.mxu0 %v1135
        %1301 = vmatprep.subr.bf16.mxu0 %v1128
        %1302 = vmatpush1.bf16.msra.mxu0 %v1127
        %1303 = vmatprep.subr.bf16.mxu0 %v1120
        %1304 = vmatpush1.bf16.msra.mxu0 %v1119
        %1305 = vmatprep.subr.bf16.mxu0 %v1112
        %1306 = vmatpush1.bf16.msra.mxu0 %v1111
        %1307 = vmatprep.subr.bf16.mxu0 %v1104
        %1308 = vmatpush1.bf16.msra.mxu0 %v1103
        %1309 = vmatprep.subr.bf16.mxu0 %v1096
        %1310 = vmatpush1.bf16.msra.mxu0 %v1095
        %1311 = vmatprep.subr.bf16.mxu0 %v1088
        %1312 = vmatpush1.bf16.msra.mxu0 %v1087
        %1313 = vmatprep.subr.bf16.mxu0 0
        %1314 = vmatpush2.bf16.msra.mxu0 0
        %1315 = vmatprep.subr.bf16.mxu0 0
        %1316 = vmatpush2.bf16.msra.mxu0 0
        %1317 = vmatprep.subr.bf16.mxu0 0
        %1318 = vmatpush2.bf16.msra.mxu0 0
        %1319 = vmatprep.subr.bf16.mxu0 0
        %1320 = vmatpush2.bf16.msra.mxu0 0
        %1321 = vmatprep.subr.bf16.mxu0 0
        %1322 = vmatpush2.bf16.msra.mxu0 0
        %1323 = vmatprep.subr.bf16.mxu0 0
        %1324 = vmatpush2.bf16.msra.mxu0 0
        %1325 = vmatprep.subr.bf16.mxu0 0
        %1326 = vmatpush2.bf16.msra.mxu0 0
        %1327 = vmatprep.subr.bf16.mxu0 0
        %1328 = vmatpush2.bf16.msra.mxu0 0
        %1329 = vmatprep.mubr.bf16.mxu0 0
        %1330 = vmatmul.mubr.bf16.gmra.mxu0 %v784
        %v1331 = vpop.f32.mrf.mxu0
        %v1332 = vadd.f32 %v870, %v1331
        %v1333 = vpop.f32.mrf.mxu0
        %v1334 = vadd.f32 %v874, %v1333
        %v1335 = vpop.f32.mrf.mxu0
        %v1336 = vadd.f32 %v870, %v1335
        %v1337 = vpop.f32.mrf.mxu0
        %v1338 = vadd.f32 %v874, %v1337
        %1339 = vdwg.mxu0
        %1340 = vmatprep.subr.bf16.mxu0 %v1146
        %1341 = vmatpush1.bf16.msra.mxu0 %v1145
        %1342 = vmatprep.subr.bf16.mxu0 %v1138
        %1343 = vmatpush1.bf16.msra.mxu0 %v1137
        %1344 = vmatprep.subr.bf16.mxu0 %v1130
        %1345 = vmatpush1.bf16.msra.mxu0 %v1129
        %1346 = vmatprep.subr.bf16.mxu0 %v1122
        %1347 = vmatpush1.bf16.msra.mxu0 %v1121
        %1348 = vmatprep.subr.bf16.mxu0 %v1114
        %1349 = vmatpush1.bf16.msra.mxu0 %v1113
        %1350 = vmatprep.subr.bf16.mxu0 %v1106
        %1351 = vmatpush1.bf16.msra.mxu0 %v1105
        %1352 = vmatprep.subr.bf16.mxu0 %v1098
        %1353 = vmatpush1.bf16.msra.mxu0 %v1097
        %1354 = vmatprep.subr.bf16.mxu0 %v1090
        %1355 = vmatpush1.bf16.msra.mxu0 %v1089
        %1356 = vmatprep.subr.bf16.mxu0 0
        %1357 = vmatpush2.bf16.msra.mxu0 0
        %1358 = vmatprep.subr.bf16.mxu0 0
        %1359 = vmatpush2.bf16.msra.mxu0 0
        %1360 = vmatprep.subr.bf16.mxu0 0
        %1361 = vmatpush2.bf16.msra.mxu0 0
        %1362 = vmatprep.subr.bf16.mxu0 0
        %1363 = vmatpush2.bf16.msra.mxu0 0
        %1364 = vmatprep.subr.bf16.mxu0 0
        %1365 = vmatpush2.bf16.msra.mxu0 0
        %1366 = vmatprep.subr.bf16.mxu0 0
        %1367 = vmatpush2.bf16.msra.mxu0 0
        %1368 = vmatprep.subr.bf16.mxu0 0
        %1369 = vmatpush2.bf16.msra.mxu0 0
        %1370 = vmatprep.subr.bf16.mxu0 0
        %1371 = vmatpush2.bf16.msra.mxu0 0
        %1372 = vmatprep.mubr.bf16.mxu0 0
        %1373 = vmatmul.mubr.bf16.gmra.mxu0 %v784
        %v1374 = vpop.f32.mrf.mxu0
        %v1375 = vadd.f32 %v878, %v1374
        %v1376 = vpop.f32.mrf.mxu0
        %v1377 = vadd.f32 %v882, %v1376
        %v1378 = vpop.f32.mrf.mxu0
        %v1379 = vadd.f32 %v878, %v1378
        %v1380 = vpop.f32.mrf.mxu0
        %v1381 = vadd.f32 %v882, %v1380
        %1382 = vdwg.mxu0
        %v1383 = vmax.f32 %v1246, 0.0
        %v1384 = vmax.f32 %v1248, 0.0
        %v1385 = vmax.f32 %v1289, 0.0
        %v1386 = vmax.f32 %v1291, 0.0
        %v1387 = vmax.f32 %v1332, 0.0
        %v1388 = vmax.f32 %v1334, 0.0
        %v1389 = vmax.f32 %v1375, 0.0
        %v1390 = vmax.f32 %v1377, 0.0
        %v1391 = vmax.f32 %v1250, 0.0
        %v1392 = vmax.f32 %v1252, 0.0
        %v1393 = vmax.f32 %v1293, 0.0
        %v1394 = vmax.f32 %v1295, 0.0
        %v1395 = vmax.f32 %v1336, 0.0
        %v1396 = vmax.f32 %v1338, 0.0
        %v1397 = vmax.f32 %v1379, 0.0
        %v1398 = vmax.f32 %v1381, 0.0
        %v1399 = vmax.f32 %v1383, %v1391
        %v1400 = vmax.f32 %v1384, %v1392
        %v1401 = vmax.f32 %v1385, %v1393
        %v1402 = vmax.f32 %v1386, %v1394
        %v1403 = vmax.f32 %v1387, %v1395
        %v1404 = vmax.f32 %v1388, %v1396
        %v1405 = vmax.f32 %v1389, %v1397
        %v1406 = vmax.f32 %v1390, %v1398
        %v1407 = vrot.slane %v1399, 4
        %v1408 = vmax.f32 %v1399, %v1407
        %v1409 = vrot.slane %v1408, 2
        %v1410 = vmax.f32 %v1408, %v1409
        %v1411 = vrot.slane %v1410, 1
        %v1412 = vmax.f32 %v1410, %v1411
        %v1413 = vrot.slane %v1400, 4
        %v1414 = vmax.f32 %v1400, %v1413
        %v1415 = vrot.slane %v1414, 2
        %v1416 = vmax.f32 %v1414, %v1415
        %v1417 = vrot.slane %v1416, 1
        %v1418 = vmax.f32 %v1416, %v1417
        %v1419 = vrot.slane %v1401, 4
        %v1420 = vmax.f32 %v1401, %v1419
        %v1421 = vrot.slane %v1420, 2
        %v1422 = vmax.f32 %v1420, %v1421
        %v1423 = vrot.slane %v1422, 1
        %v1424 = vmax.f32 %v1422, %v1423
        %v1425 = vrot.slane %v1402, 4
        %v1426 = vmax.f32 %v1402, %v1425
        %v1427 = vrot.slane %v1426, 2
        %v1428 = vmax.f32 %v1426, %v1427
        %v1429 = vrot.slane %v1428, 1
        %v1430 = vmax.f32 %v1428, %v1429
        %v1431 = vrot.slane %v1403, 4
        %v1432 = vmax.f32 %v1403, %v1431
        %v1433 = vrot.slane %v1432, 2
        %v1434 = vmax.f32 %v1432, %v1433
        %v1435 = vrot.slane %v1434, 1
        %v1436 = vmax.f32 %v1434, %v1435
        %v1437 = vrot.slane %v1404, 4
        %v1438 = vmax.f32 %v1404, %v1437
        %v1439 = vrot.slane %v1438, 2
        %v1440 = vmax.f32 %v1438, %v1439
        %v1441 = vrot.slane %v1440, 1
        %v1442 = vmax.f32 %v1440, %v1441
        %v1443 = vrot.slane %v1405, 4
        %v1444 = vmax.f32 %v1405, %v1443
        %v1445 = vrot.slane %v1444, 2
        %v1446 = vmax.f32 %v1444, %v1445
        %v1447 = vrot.slane %v1446, 1
        %v1448 = vmax.f32 %v1446, %v1447
        %v1449 = vrot.slane %v1406, 4
        %v1450 = vmax.f32 %v1406, %v1449
        %v1451 = vrot.slane %v1450, 2
        %v1452 = vmax.f32 %v1450, %v1451
        %v1453 = vrot.slane %v1452, 1
        %v1454 = vmax.f32 %v1452, %v1453
        %v1455 = vld [vmem:[%s446] sm:$0xff]
        %v1464 = vcombine.low %v1412, %v1418
        %v1465 = vcombine.low %v1424, %v1430
        %v1466 = vcombine.low %v1436, %v1442
        %v1467 = vcombine.low %v1448, %v1454
        %v1469 = vunpack.c.l.s4 1966171168
        %v1470 = vunpack.c.0.s8 %v1469
        %v1471 = vlaneseq
        %v1472 = vshrl.u32 %v1471, 7
        %v1473 = vsub.s32 %v1470, %v1472
        %v1474 = vrot.slane %v1464, %v1473
        %v1476 = vunpack.c.l.s4 1966171168
        %v1477 = vunpack.c.0.s8 %v1476
        %v1478 = vlaneseq
        %v1479 = vshrl.u32 %v1478, 7
        %v1480 = vsub.s32 %v1477, %v1479
        %v1481 = vrot.slane %v1465, %v1480
        %v1483 = vunpack.c.l.s4 1966171168
        %v1484 = vunpack.c.0.s8 %v1483
        %v1485 = vlaneseq
        %v1486 = vshrl.u32 %v1485, 7
        %v1487 = vsub.s32 %v1484, %v1486
        %v1488 = vrot.slane %v1466, %v1487
        %v1490 = vunpack.c.l.s4 1966171168
        %v1491 = vunpack.c.0.s8 %v1490
        %v1492 = vlaneseq
        %v1493 = vshrl.u32 %v1492, 7
        %v1494 = vsub.s32 %v1491, %v1493
        %v1495 = vrot.slane %v1467, %v1494
        %v1496 = vcombine.low %v1474, %v1481
        %v1497 = vcombine.low %v1488, %v1495
        %v1499 = vunpack.c.l.s4 1966171168
        %v1500 = vunpack.c.0.s8 %v1499
        %v1501 = vlaneseq
        %v1502 = vshrl.u32 %v1501, 7
        %v1503 = vsub.s32 %v1500, %v1502
        %v1504 = vrot.slane %v1496, %v1503
        %v1506 = vunpack.c.l.s4 1966171168
        %v1507 = vunpack.c.0.s8 %v1506
        %v1508 = vlaneseq
        %v1509 = vshrl.u32 %v1508, 7
        %v1510 = vsub.s32 %v1507, %v1509
        %v1511 = vrot.slane %v1497, %v1510
        %v1512 = vcombine.low %v1504, %v1511
        %v1514 = vmax.f32 %v1455, %v1512
        %1515 = vst [vmem:[%s446] sm:$0xff] %v1514
        %s1516 = sand.u32 %s285, 1
        %s1517 = scalar_lea.sflag [#allocation4], %s1516
        %s1518 = sand.u32 %s285, 1
        %s1519 = smul.addr %s1518, 8
        %s1520 = scalar_lea.vmem [#allocation8], %s1519
        // Predicated region
        $region81: #{tpu_custom_call.1} parent=63 // pred_check
          %p1521 = pneg %p295
        $region82: #{tpu_custom_call.1} parent=63 // pred_check_branch
          %1523 = sbr.rel (%p1521) target = $region84
        $region83: #{tpu_custom_call.1} parent=63 // pred_region
          %s1525 = ssub.s32 128, 128
          %1526 = vsyncadd %s1517, %s1525
          %s1527 = smul.addr %s31, 8
          %s1528 = smul.addr %s1527, 16
          %s1529 = scalar_lea.hbm %s11, %s1528
          %s1531 = sshll.u32 %s1520, 4
          %s1532 = int_to_ptr.vmem [resolvable:$true] %s1531
          %1534 = dma.vmem_to_hbm [thread:$0]  %s1532, 128, %s1529, %s1517
        $region84: #{tpu_custom_call.1} parent=63 // pred_fallthru
          _
      $region64: #{tpu_custom_call.1} parent=5 // pred_fallthru
        _
      %p1535 = scmp.le.s32.totalorder 2, %s22
      // Predicated region
      $region85: #{tpu_custom_call.1} parent=5 // pred_check
        %p1536 = pneg %p1535
      $region86: #{tpu_custom_call.1} parent=5 // pred_check_branch
        %1538 = sbr.rel (%p1536) target = $region88
      $region87: #{tpu_custom_call.1} parent=5 // pred_region
        %s1539 = ssub.s32 %s22, 2
        // Predicated region
        $region89: #{tpu_custom_call.1} parent=87 // pred_check
          %p1540 = pneg %p301
        $region90: #{tpu_custom_call.1} parent=87 // pred_check_branch
          %1542 = sbr.rel (%p1540) target = $region92
        $region91: #{tpu_custom_call.1} parent=87 // pred_region
          %s1543 = sand.u32 %s286, 1
          %s1544 = scalar_lea.sflag [#allocation4], %s1543
          %s1545 = sand.u32 %s286, 1
          %s1546 = smul.addr %s1545, 8
          %s1547 = scalar_lea.vmem [#allocation8], %s1546
          %1548 = dma.done %s1544, 128
        $region92: #{tpu_custom_call.1} parent=87 // pred_fallthru
          _
      $region88: #{tpu_custom_call.1} parent=5 // pred_fallthru
        _
    $region6: #{tpu_custom_call.1} parent=1 // loop_footer
      %s26 = sadd.s32 1, %s22
    $region7: #{tpu_custom_call.1} parent=1 // loop_footer_branch
      %21 = sbr.rel target = $region3
    $region8: #{tpu_custom_call.1} parent=1 // loop_exit
      _
    %1549 = vsyncpa [#allocation3], 1
    %s1550 = scalar_lea.sflag [#allocation3], 1
    %1551 = vsyncpa %s1550, 1
    %1552 = vsyncpa [#allocation6], 1
    %1553 = vsyncpa [#allocation4], 1
    %s1554 = scalar_lea.sflag [#allocation4], 1
    %1555 = vsyncpa %s1554, 1

</llo_original>
